<compile_context>
chip_gen: v5e
topology: v5e:2x2
jax: 0.10.0
libtpu: 0.0.40
codegen_flags: <defaults>
</compile_context>

<pallas_src>
import functools
import math

import jax
import jax.numpy as jnp
from jax.experimental import pallas as pl
from jax.experimental.pallas import tpu as pltpu


def _fused_cnn_kernel(x_ref, w_ref, b_ref, o_ref, buf0, buf1, imcol, *,
                      num_layers, K, L, padding, B_blk):
    """One grid step: run the whole conv/ReLU stack for B_blk batch elements.

    x_ref : (B_blk, L, C)           channel-padded input block (NLC)
    w_ref : (num_layers, K*C, C)    taps folded into the contraction dim
    b_ref : (num_layers, 1, C)
    o_ref : (B_blk, L, C)           last-layer output (padded channels)
    buf0/buf1 : (B_blk, Lp, C)      ping-pong activation buffers (VMEM)
    imcol     : (B_blk*L, K*C)      im2col staging buffer (VMEM)
    """
    C = o_ref.shape[-1]

    # Zero ONLY the length-halo rows; the interiors are fully overwritten every
    # step.  Done per-step (not pl.when(program_id==0)) for megacore safety:
    # scratch is per-TensorCore and only one core ever sees grid step 0.
    if padding > 0:
        halo = jnp.zeros((B_blk, padding, C), jnp.float32)
        for buf in (buf0, buf1):
            buf[:, :padding, :] = halo
            buf[:, L + padding:, :] = halo

    # Load the (already channel-padded) input block into buf0's interior.
    buf0[:, padding:padding + L, :] = x_ref[...]

    bufs = (buf0, buf1)
    for i in range(num_layers):                     # static unrolled layer loop
        src = bufs[i % 2]
        dst = bufs[(i + 1) % 2]
        last = i == num_layers - 1

        # im2col: for every packed batch element, pack its K shifted windows
        # lane-contiguously into rows [b*L, (b+1)*L) of imcol.  All slices are
        # static; destination offsets are sublane/lane aligned (L%8==0, C=128).
        for b in range(B_blk):                      # static unrolled
            for k in range(K):
                imcol[b * L:(b + 1) * L, k * C:(k + 1) * C] = src[b, k:k + L, :]

        # ONE MXU matmul per layer over all packed batch elements:
        # (B_blk*L, K*C) @ (K*C, C), contraction = K*C.
        # TODO(synk): optionally cast imcol / w_ref to bf16 (keeping f32
        # accumulation) for 2-3x MXU throughput once accuracy vs the f32
        # PyTorch reference is signed off.
        acc = jnp.dot(imcol[...], w_ref[i], preferred_element_type=jnp.float32)
        acc = acc + b_ref[i]                        # (B_blk*L, C) + (1, C)
        if not last:
            acc = jnp.maximum(acc, 0.0)             # fused ReLU

        for b in range(B_blk):
            piece = acc[b * L:(b + 1) * L, :]
            if last:
                o_ref[b] = piece.astype(o_ref.dtype)     # lane-dense store
            else:
                dst[b, padding:padding + L, :] = piece   # stays in VMEM


def _pick_batch_block(N, L, target_rows=256, max_rows=2048):
    """Choose how many batch elements to pack per grid step.

    Targets ~256 matmul rows (fills v6e/v7x MXU; >=128 already fine on v5e),
    keeps at least 2 grid steps when the batch allows (v7x has 2 TensorCores
    and the pipeline needs >=2 steps to hide I/O DMA), and caps rows so the
    f32 im2col + ping-pong footprint stays well inside v7x's 64 MiB VMEM.
    """
    b = max(1, -(-target_rows // L))           # ceil(target_rows / L)
    b = min(b, max(1, max_rows // L))
    b = min(b, N)
    if N > 1:
        b = min(b, -(-N // 2))                 # keep grid length >= 2
    return b


def fused_cnn_forward(x_nlc_pad, w_flat, b_pad, *, num_layers, K, L, padding,
                      C, B_blk, single_buffer_params=True):
    """x_nlc_pad: (N_pad, L, C) f32 channel-padded NLC input, N_pad % B_blk == 0."""
    N_pad = x_nlc_pad.shape[0]
    assert N_pad % B_blk == 0
    G = N_pad // B_blk
    Lp = L + 2 * padding
    M = B_blk * L

    kernel = functools.partial(_fused_cnn_kernel, num_layers=num_layers, K=K,
                               L=L, padding=padding, B_blk=B_blk)

    def _const_spec(shape):
        # Weights/bias never change across the grid -> single buffer them.
        if single_buffer_params:
            return pl.BlockSpec(shape, lambda g: (0,) * len(shape),
                                pipeline_mode=pl.Buffered(1))
        return pl.BlockSpec(shape, lambda g: (0,) * len(shape))

    # Explicit VMEM budget (v7x: 64 MiB physical / 32 MiB default scoped).
    f32b = 4
    block_io = B_blk * L * C * f32b
    w_bytes = num_layers * K * C * C * f32b + num_layers * C * f32b
    scratch_bytes = (2 * B_blk * Lp * C + M * K * C) * f32b
    w_copies = 1 if single_buffer_params else 2
    vmem_need = 2 * 2 * block_io + w_copies * w_bytes + scratch_bytes
    vmem_limit = int(min(max(2 * vmem_need, 16 << 20), 48 << 20))

    flops = 2 * N_pad * L * (K * C) * C * num_layers
    bytes_accessed = f32b * (x_nlc_pad.size + w_flat.size + b_pad.size
                             + N_pad * L * C)

    return pl.pallas_call(
        kernel,
        out_shape=jax.ShapeDtypeStruct((N_pad, L, C), jnp.float32),
        grid=(G,),
        in_specs=[
            pl.BlockSpec((B_blk, L, C), lambda g: (g, 0, 0)),
            _const_spec((num_layers, K * C, C)),
            _const_spec((num_layers, 1, C)),
        ],
        out_specs=pl.BlockSpec((B_blk, L, C), lambda g: (g, 0, 0)),
        scratch_shapes=[
            pltpu.VMEM((B_blk, Lp, C), jnp.float32),
            pltpu.VMEM((B_blk, Lp, C), jnp.float32),
            pltpu.VMEM((M, K * C), jnp.float32),
        ],
        compiler_params=pltpu.CompilerParams(
            dimension_semantics=("parallel",),
            vmem_limit_bytes=vmem_limit),
        cost_estimate=pl.CostEstimate(flops=flops, transcendentals=0,
                                      bytes_accessed=bytes_accessed),
    )(x_nlc_pad, w_flat, b_pad)


class PallasCNN:
    """Mirror of the PyTorch CNN module (Conv1d / ReLU stack), fully fused."""

    def __init__(self, input_dim, hidden_dim, output_dim, num_layers=3,
                 kernel_size=3, padding=1, seed=0):
        # Fused kernel keeps activations at one length in VMEM, so it assumes
        # "same"-length convolutions (the module's default 3/1 config).
        assert 2 * padding == kernel_size - 1, "fused path assumes 'same' convs"
        # TODO(synk): support length-changing kernel_size/padding combos and
        # halo-overlapped L tiling (manual DMA) for very long sequences.
        # TODO(synk): v5e-preferred variant: drop the im2col buffer and
        # accumulate K per-tap (C-deep) matmuls instead (same MXU passes on the
        # 128-deep v5e MXU, fewer stores); keep im2col on v6e/v7x.

        self.num_layers = num_layers
        self.kernel_size = kernel_size
        self.padding = padding
        self.output_dim = output_dim
        self._single_buffer_params = None   # resolved (probed) on first call
        # Pad every channel dim to a multiple of 128 (lane width).
        self.C = 128 * (-(-max(input_dim, hidden_dim, output_dim) // 128))

        self.params = []   # real-shaped params, used by the pure-JAX reference
        key = jax.random.PRNGKey(seed)
        w_stack = jnp.zeros((num_layers, kernel_size, self.C, self.C), jnp.float32)
        b_stack = jnp.zeros((num_layers, 1, self.C), jnp.float32)
        for i in range(num_layers):
            in_ch = input_dim if i == 0 else hidden_dim
            out_ch = hidden_dim if i < num_layers - 1 else output_dim
            key, kw, kb = jax.random.split(key, 3)
            # PyTorch Conv1d default init: U(-bound, bound), bound = 1/sqrt(fan_in)
            bound = 1.0 / math.sqrt(in_ch * kernel_size)
            # PyTorch weight layout (Cout, Cin, K) -> kernel layout (K, Cin, Cout)
            w_oik = jax.random.uniform(kw, (out_ch, in_ch, kernel_size),
                                       jnp.float32, -bound, bound)
            w_kio = jnp.transpose(w_oik, (2, 1, 0))
            bias = jax.random.uniform(kb, (out_ch,), jnp.float32, -bound, bound)
            self.params.append((w_kio, bias))
            # Zero-padded lane-wide copies: padded weight columns / bias entries
            # are exactly zero so padded channels stay exactly 0 through ReLU.
            w_stack = w_stack.at[i, :, :in_ch, :out_ch].set(w_kio)
            b_stack = b_stack.at[i, 0, :out_ch].set(bias)

        # Fold the K taps into the contraction dim (im2col weight layout).
        self.w_flat = w_stack.reshape(num_layers, kernel_size * self.C, self.C)
        self.b_pad = b_stack

    def _forward(self, x_pad, L, B_blk, single_buffer_params):
        return fused_cnn_forward(
            x_pad, self.w_flat, self.b_pad, num_layers=self.num_layers,
            K=self.kernel_size, L=L, padding=self.padding, C=self.C,
            B_blk=B_blk, single_buffer_params=single_buffer_params)

    def __call__(self, x_ncl):
        # x_ncl: (N, Cin, L)  -- PyTorch NCL convention.
        # TODO(synk): expose an NLC end-to-end entry point so channels-last
        # callers skip the two wrapper transposes (they are HBM-roundtrip ops).
        N, Cin, L = x_ncl.shape
        B_blk = _pick_batch_block(N, L)
        N_pad = -(-N // B_blk) * B_blk

        x = jnp.transpose(x_ncl, (0, 2, 1))                        # -> NLC
        x = jnp.pad(x, ((0, N_pad - N), (0, 0), (0, self.C - Cin)))

        if self._single_buffer_params is None:
            # Probe pl.Buffered(1) support once; fall back to default
            # double-buffered weight/bias specs if this JAX/Mosaic rejects it.
            try:
                y = jax.block_until_ready(self._forward(x, L, B_blk, True))
                self._single_buffer_params = True
            except Exception:
                self._single_buffer_params = False
                y = self._forward(x, L, B_blk, False)
        else:
            y = self._forward(x, L, B_blk, self._single_buffer_params)

        y = y[:N, :, :self.output_dim]           # drop batch / lane padding
        return jnp.transpose(y, (0, 2, 1))       # back to NCL


def _reference_forward(model, x_ncl):
    """Pure-JAX reference (lax conv) for verification."""
    x = x_ncl
    for i, (w_kio, b) in enumerate(model.params):
        w_oik = jnp.transpose(w_kio, (2, 1, 0))  # (Cout, Cin, K)
        y = jax.lax.conv_general_dilated(
            x, w_oik, window_strides=(1,),
            padding=[(model.padding, model.padding)],
            dimension_numbers=("NCH", "OIH", "NCH"))
        y = y + b[None, :, None]
        if i < model.num_layers - 1:
            y = jnp.maximum(y, 0.0)
        x = y
    return x


if __name__ == "__main__":
    # Small shapes consistent with the module; batch=4 so the packed
    # batch-block path (B_blk=2) and a 2-step grid are both exercised.
    batch, input_dim, hidden_dim, output_dim, seq = 4, 4, 32, 8, 16

    key = jax.random.PRNGKey(0)
    x = jax.random.normal(key, (batch, input_dim, seq), jnp.float32)  # NCL

    model = PallasCNN(input_dim, hidden_dim, output_dim,
                      num_layers=3, kernel_size=3, padding=1, seed=0)

    out = jax.block_until_ready(model(x))
    ref = jax.block_until_ready(_reference_forward(model, x))

    assert out.shape == (batch, output_dim, seq), out.shape
    assert jnp.allclose(out, ref, atol=1e-4, rtol=1e-4), \
        float(jnp.max(jnp.abs(out - ref)))

    print("KERNEL_OK")
</pallas_src>

<mosaic_0001>
module attributes {stable_mosaic.version = 11 : i64} {
  func.func @_fused_cnn_kernel(%arg0: i32, %arg1: memref<2x16x128xf32, #tpu.memory_space<vmem>>, %arg2: memref<3x384x128xf32, #tpu.memory_space<vmem>>, %arg3: memref<3x1x128xf32, #tpu.memory_space<vmem>>, %arg4: memref<2x16x128xf32, #tpu.memory_space<vmem>>, %arg5: memref<2x18x128xf32, #tpu.memory_space<vmem>>, %arg6: memref<2x18x128xf32, #tpu.memory_space<vmem>>, %arg7: memref<32x384xf32, #tpu.memory_space<vmem>>) attributes {dimension_semantics = [#tpu.dimension_semantics<parallel>], iteration_bounds = array<i64: 2>, scalar_prefetch = 0 : i64, scratch_operands = 3 : i64, tpu.core_type = #tpu.core_type<tc>, window_params = [{transform_indices = @transform_0, window_bounds = array<i64: 2, 16, 128>}, {pipeline_mode = #tpu.pipeline_mode<synchronous>, transform_indices = @transform_1, window_bounds = array<i64: 3, 384, 128>}, {pipeline_mode = #tpu.pipeline_mode<synchronous>, transform_indices = @transform_2, window_bounds = array<i64: 3, 1, 128>}, {transform_indices = @transform_3, window_bounds = array<i64: 2, 16, 128>}]} {
    %cst = arith.constant 0.000000e+00 : f32
    %0 = vector.broadcast %cst : f32 to vector<2x1x128xf32>
    %c0 = arith.constant 0 : index
    %c0_0 = arith.constant 0 : index
    %c0_1 = arith.constant 0 : index
    %1 = vector.load %arg5[%c0, %c0_0, %c0_1] : memref<2x18x128xf32, #tpu.memory_space<vmem>>, vector<2x1x128xf32>
    tpu.vector_store %arg5[%c0, %c0_0, %c0_1], %0 {strides = array<i32>} : memref<2x18x128xf32, #tpu.memory_space<vmem>>, vector<2x1x128xf32>,
    %c0_2 = arith.constant 0 : index
    %c17 = arith.constant 17 : index
    %c0_3 = arith.constant 0 : index
    %2 = vector.load %arg5[%c0_2, %c17, %c0_3] : memref<2x18x128xf32, #tpu.memory_space<vmem>>, vector<2x1x128xf32>
    tpu.vector_store %arg5[%c0_2, %c17, %c0_3], %0 {strides = array<i32>} : memref<2x18x128xf32, #tpu.memory_space<vmem>>, vector<2x1x128xf32>,
    %c0_4 = arith.constant 0 : index
    %c0_5 = arith.constant 0 : index
    %c0_6 = arith.constant 0 : index
    %3 = vector.load %arg6[%c0_4, %c0_5, %c0_6] : memref<2x18x128xf32, #tpu.memory_space<vmem>>, vector<2x1x128xf32>
    tpu.vector_store %arg6[%c0_4, %c0_5, %c0_6], %0 {strides = array<i32>} : memref<2x18x128xf32, #tpu.memory_space<vmem>>, vector<2x1x128xf32>,
    %c0_7 = arith.constant 0 : index
    %c17_8 = arith.constant 17 : index
    %c0_9 = arith.constant 0 : index
    %4 = vector.load %arg6[%c0_7, %c17_8, %c0_9] : memref<2x18x128xf32, #tpu.memory_space<vmem>>, vector<2x1x128xf32>
    tpu.vector_store %arg6[%c0_7, %c17_8, %c0_9], %0 {strides = array<i32>} : memref<2x18x128xf32, #tpu.memory_space<vmem>>, vector<2x1x128xf32>,
    %c0_10 = arith.constant 0 : index
    %c0_11 = arith.constant 0 : index
    %c0_12 = arith.constant 0 : index
    %5 = vector.load %arg1[%c0_10, %c0_11, %c0_12] : memref<2x16x128xf32, #tpu.memory_space<vmem>>, vector<2x16x128xf32>
    %c0_13 = arith.constant 0 : index
    %c1 = arith.constant 1 : index
    %c0_14 = arith.constant 0 : index
    %6 = vector.load %arg5[%c0_13, %c1, %c0_14] : memref<2x18x128xf32, #tpu.memory_space<vmem>>, vector<2x16x128xf32>
    tpu.vector_store %arg5[%c0_13, %c1, %c0_14], %5 {strides = array<i32>} : memref<2x18x128xf32, #tpu.memory_space<vmem>>, vector<2x16x128xf32>,
    %c0_15 = arith.constant 0 : index
    %c0_16 = arith.constant 0 : index
    %c0_17 = arith.constant 0 : index
    %7 = vector.load %arg5[%c0_15, %c0_16, %c0_17] : memref<2x18x128xf32, #tpu.memory_space<vmem>>, vector<1x16x128xf32>
    %8 = vector.shape_cast %7 : vector<1x16x128xf32> to vector<16x128xf32>
    %c0_18 = arith.constant 0 : index
    %c0_19 = arith.constant 0 : index
    %9 = vector.load %arg7[%c0_18, %c0_19] : memref<32x384xf32, #tpu.memory_space<vmem>>, vector<16x128xf32>
    tpu.vector_store %arg7[%c0_18, %c0_19], %8 {strides = array<i32>} : memref<32x384xf32, #tpu.memory_space<vmem>>, vector<16x128xf32>,
    %c0_20 = arith.constant 0 : index
    %c1_21 = arith.constant 1 : index
    %c0_22 = arith.constant 0 : index
    %10 = vector.load %arg5[%c0_20, %c1_21, %c0_22] : memref<2x18x128xf32, #tpu.memory_space<vmem>>, vector<1x16x128xf32>
    %11 = vector.shape_cast %10 : vector<1x16x128xf32> to vector<16x128xf32>
    %c0_23 = arith.constant 0 : index
    %c128 = arith.constant 128 : index
    %12 = vector.load %arg7[%c0_23, %c128] : memref<32x384xf32, #tpu.memory_space<vmem>>, vector<16x128xf32>
    tpu.vector_store %arg7[%c0_23, %c128], %11 {strides = array<i32>} : memref<32x384xf32, #tpu.memory_space<vmem>>, vector<16x128xf32>,
    %c0_24 = arith.constant 0 : index
    %c2 = arith.constant 2 : index
    %c0_25 = arith.constant 0 : index
    %13 = vector.load %arg5[%c0_24, %c2, %c0_25] : memref<2x18x128xf32, #tpu.memory_space<vmem>>, vector<1x16x128xf32>
    %14 = vector.shape_cast %13 : vector<1x16x128xf32> to vector<16x128xf32>
    %c0_26 = arith.constant 0 : index
    %c256 = arith.constant 256 : index
    %15 = vector.load %arg7[%c0_26, %c256] : memref<32x384xf32, #tpu.memory_space<vmem>>, vector<16x128xf32>
    tpu.vector_store %arg7[%c0_26, %c256], %14 {strides = array<i32>} : memref<32x384xf32, #tpu.memory_space<vmem>>, vector<16x128xf32>,
    %c1_27 = arith.constant 1 : index
    %c0_28 = arith.constant 0 : index
    %c0_29 = arith.constant 0 : index
    %16 = vector.load %arg5[%c1_27, %c0_28, %c0_29] : memref<2x18x128xf32, #tpu.memory_space<vmem>>, vector<1x16x128xf32>
    %17 = vector.shape_cast %16 : vector<1x16x128xf32> to vector<16x128xf32>
    %c16 = arith.constant 16 : index
    %c0_30 = arith.constant 0 : index
    %18 = vector.load %arg7[%c16, %c0_30] : memref<32x384xf32, #tpu.memory_space<vmem>>, vector<16x128xf32>
    tpu.vector_store %arg7[%c16, %c0_30], %17 {strides = array<i32>} : memref<32x384xf32, #tpu.memory_space<vmem>>, vector<16x128xf32>,
    %c1_31 = arith.constant 1 : index
    %c1_32 = arith.constant 1 : index
    %c0_33 = arith.constant 0 : index
    %19 = vector.load %arg5[%c1_31, %c1_32, %c0_33] : memref<2x18x128xf32, #tpu.memory_space<vmem>>, vector<1x16x128xf32>
    %20 = vector.shape_cast %19 : vector<1x16x128xf32> to vector<16x128xf32>
    %c16_34 = arith.constant 16 : index
    %c128_35 = arith.constant 128 : index
    %21 = vector.load %arg7[%c16_34, %c128_35] : memref<32x384xf32, #tpu.memory_space<vmem>>, vector<16x128xf32>
    tpu.vector_store %arg7[%c16_34, %c128_35], %20 {strides = array<i32>} : memref<32x384xf32, #tpu.memory_space<vmem>>, vector<16x128xf32>,
    %c1_36 = arith.constant 1 : index
    %c2_37 = arith.constant 2 : index
    %c0_38 = arith.constant 0 : index
    %22 = vector.load %arg5[%c1_36, %c2_37, %c0_38] : memref<2x18x128xf32, #tpu.memory_space<vmem>>, vector<1x16x128xf32>
    %23 = vector.shape_cast %22 : vector<1x16x128xf32> to vector<16x128xf32>
    %c16_39 = arith.constant 16 : index
    %c256_40 = arith.constant 256 : index
    %24 = vector.load %arg7[%c16_39, %c256_40] : memref<32x384xf32, #tpu.memory_space<vmem>>, vector<16x128xf32>
    tpu.vector_store %arg7[%c16_39, %c256_40], %23 {strides = array<i32>} : memref<32x384xf32, #tpu.memory_space<vmem>>, vector<16x128xf32>,
    %c0_41 = arith.constant 0 : index
    %c0_42 = arith.constant 0 : index
    %25 = vector.load %arg7[%c0_41, %c0_42] : memref<32x384xf32, #tpu.memory_space<vmem>>, vector<32x384xf32>
    %c0_43 = arith.constant 0 : index
    %c0_44 = arith.constant 0 : index
    %c0_45 = arith.constant 0 : index
    %26 = vector.load %arg2[%c0_43, %c0_44, %c0_45] : memref<3x384x128xf32, #tpu.memory_space<vmem>>, vector<1x384x128xf32>
    %27 = vector.shape_cast %26 : vector<1x384x128xf32> to vector<384x128xf32>
    %cst_46 = arith.constant dense<0.000000e+00> : vector<32x128xf32>
    %28 = tpu.matmul %25, %27, %cst_46 {dimension_numbers = #tpu.dot_dimension_numbers<[1], [0], [0], [1], [0, 0, 1, 1], [], []>} : vector<32x384xf32>, vector<384x128xf32>, vector<32x128xf32> -> vector<32x128xf32>
    %c0_47 = arith.constant 0 : index
    %c0_48 = arith.constant 0 : index
    %c0_49 = arith.constant 0 : index
    %29 = vector.load %arg3[%c0_47, %c0_48, %c0_49] : memref<3x1x128xf32, #tpu.memory_space<vmem>>, vector<1x1x128xf32>
    %30 = vector.shape_cast %29 : vector<1x1x128xf32> to vector<1x128xf32>
    %31 = vector.broadcast %30 : vector<1x128xf32> to vector<32x128xf32>
    %32 = arith.addf %28, %31 : vector<32x128xf32>
    %cst_50 = arith.constant 0.000000e+00 : f32
    %33 = vector.broadcast %cst_50 : f32 to vector<32x128xf32>
    %34 = arith.maximumf %32, %33 : vector<32x128xf32>
    %35 = vector.extract_strided_slice %34 {offsets = [0, 0], sizes = [16, 128], strides = [1, 1]} : vector<32x128xf32> to vector<16x128xf32>
    %c0_51 = arith.constant 0 : index
    %c1_52 = arith.constant 1 : index
    %c0_53 = arith.constant 0 : index
    %36 = vector.load %arg6[%c0_51, %c1_52, %c0_53] : memref<2x18x128xf32, #tpu.memory_space<vmem>>, vector<1x16x128xf32>
    %37 = vector.shape_cast %36 : vector<1x16x128xf32> to vector<16x128xf32>
    %38 = vector.shape_cast %35 : vector<16x128xf32> to vector<1x16x128xf32>
    tpu.vector_store %arg6[%c0_51, %c1_52, %c0_53], %38 {strides = array<i32>} : memref<2x18x128xf32, #tpu.memory_space<vmem>>, vector<1x16x128xf32>,
    %39 = vector.extract_strided_slice %34 {offsets = [16, 0], sizes = [16, 128], strides = [1, 1]} : vector<32x128xf32> to vector<16x128xf32>
    %c1_54 = arith.constant 1 : index
    %c1_55 = arith.constant 1 : index
    %c0_56 = arith.constant 0 : index
    %40 = vector.load %arg6[%c1_54, %c1_55, %c0_56] : memref<2x18x128xf32, #tpu.memory_space<vmem>>, vector<1x16x128xf32>
    %41 = vector.shape_cast %40 : vector<1x16x128xf32> to vector<16x128xf32>
    %42 = vector.shape_cast %39 : vector<16x128xf32> to vector<1x16x128xf32>
    tpu.vector_store %arg6[%c1_54, %c1_55, %c0_56], %42 {strides = array<i32>} : memref<2x18x128xf32, #tpu.memory_space<vmem>>, vector<1x16x128xf32>,
    %c0_57 = arith.constant 0 : index
    %c0_58 = arith.constant 0 : index
    %c0_59 = arith.constant 0 : index
    %43 = vector.load %arg6[%c0_57, %c0_58, %c0_59] : memref<2x18x128xf32, #tpu.memory_space<vmem>>, vector<1x16x128xf32>
    %44 = vector.shape_cast %43 : vector<1x16x128xf32> to vector<16x128xf32>
    %c0_60 = arith.constant 0 : index
    %c0_61 = arith.constant 0 : index
    %45 = vector.load %arg7[%c0_60, %c0_61] : memref<32x384xf32, #tpu.memory_space<vmem>>, vector<16x128xf32>
    tpu.vector_store %arg7[%c0_60, %c0_61], %44 {strides = array<i32>} : memref<32x384xf32, #tpu.memory_space<vmem>>, vector<16x128xf32>,
    %c0_62 = arith.constant 0 : index
    %c1_63 = arith.constant 1 : index
    %c0_64 = arith.constant 0 : index
    %46 = vector.load %arg6[%c0_62, %c1_63, %c0_64] : memref<2x18x128xf32, #tpu.memory_space<vmem>>, vector<1x16x128xf32>
    %47 = vector.shape_cast %46 : vector<1x16x128xf32> to vector<16x128xf32>
    %c0_65 = arith.constant 0 : index
    %c128_66 = arith.constant 128 : index
    %48 = vector.load %arg7[%c0_65, %c128_66] : memref<32x384xf32, #tpu.memory_space<vmem>>, vector<16x128xf32>
    tpu.vector_store %arg7[%c0_65, %c128_66], %47 {strides = array<i32>} : memref<32x384xf32, #tpu.memory_space<vmem>>, vector<16x128xf32>,
    %c0_67 = arith.constant 0 : index
    %c2_68 = arith.constant 2 : index
    %c0_69 = arith.constant 0 : index
    %49 = vector.load %arg6[%c0_67, %c2_68, %c0_69] : memref<2x18x128xf32, #tpu.memory_space<vmem>>, vector<1x16x128xf32>
    %50 = vector.shape_cast %49 : vector<1x16x128xf32> to vector<16x128xf32>
    %c0_70 = arith.constant 0 : index
    %c256_71 = arith.constant 256 : index
    %51 = vector.load %arg7[%c0_70, %c256_71] : memref<32x384xf32, #tpu.memory_space<vmem>>, vector<16x128xf32>
    tpu.vector_store %arg7[%c0_70, %c256_71], %50 {strides = array<i32>} : memref<32x384xf32, #tpu.memory_space<vmem>>, vector<16x128xf32>,
    %c1_72 = arith.constant 1 : index
    %c0_73 = arith.constant 0 : index
    %c0_74 = arith.constant 0 : index
    %52 = vector.load %arg6[%c1_72, %c0_73, %c0_74] : memref<2x18x128xf32, #tpu.memory_space<vmem>>, vector<1x16x128xf32>
    %53 = vector.shape_cast %52 : vector<1x16x128xf32> to vector<16x128xf32>
    %c16_75 = arith.constant 16 : index
    %c0_76 = arith.constant 0 : index
    %54 = vector.load %arg7[%c16_75, %c0_76] : memref<32x384xf32, #tpu.memory_space<vmem>>, vector<16x128xf32>
    tpu.vector_store %arg7[%c16_75, %c0_76], %53 {strides = array<i32>} : memref<32x384xf32, #tpu.memory_space<vmem>>, vector<16x128xf32>,
    %c1_77 = arith.constant 1 : index
    %c1_78 = arith.constant 1 : index
    %c0_79 = arith.constant 0 : index
    %55 = vector.load %arg6[%c1_77, %c1_78, %c0_79] : memref<2x18x128xf32, #tpu.memory_space<vmem>>, vector<1x16x128xf32>
    %56 = vector.shape_cast %55 : vector<1x16x128xf32> to vector<16x128xf32>
    %c16_80 = arith.constant 16 : index
    %c128_81 = arith.constant 128 : index
    %57 = vector.load %arg7[%c16_80, %c128_81] : memref<32x384xf32, #tpu.memory_space<vmem>>, vector<16x128xf32>
    tpu.vector_store %arg7[%c16_80, %c128_81], %56 {strides = array<i32>} : memref<32x384xf32, #tpu.memory_space<vmem>>, vector<16x128xf32>,
    %c1_82 = arith.constant 1 : index
    %c2_83 = arith.constant 2 : index
    %c0_84 = arith.constant 0 : index
    %58 = vector.load %arg6[%c1_82, %c2_83, %c0_84] : memref<2x18x128xf32, #tpu.memory_space<vmem>>, vector<1x16x128xf32>
    %59 = vector.shape_cast %58 : vector<1x16x128xf32> to vector<16x128xf32>
    %c16_85 = arith.constant 16 : index
    %c256_86 = arith.constant 256 : index
    %60 = vector.load %arg7[%c16_85, %c256_86] : memref<32x384xf32, #tpu.memory_space<vmem>>, vector<16x128xf32>
    tpu.vector_store %arg7[%c16_85, %c256_86], %59 {strides = array<i32>} : memref<32x384xf32, #tpu.memory_space<vmem>>, vector<16x128xf32>,
    %c0_87 = arith.constant 0 : index
    %c0_88 = arith.constant 0 : index
    %61 = vector.load %arg7[%c0_87, %c0_88] : memref<32x384xf32, #tpu.memory_space<vmem>>, vector<32x384xf32>
    %c1_89 = arith.constant 1 : index
    %c0_90 = arith.constant 0 : index
    %c0_91 = arith.constant 0 : index
    %62 = vector.load %arg2[%c1_89, %c0_90, %c0_91] : memref<3x384x128xf32, #tpu.memory_space<vmem>>, vector<1x384x128xf32>
    %63 = vector.shape_cast %62 : vector<1x384x128xf32> to vector<384x128xf32>
    %cst_92 = arith.constant dense<0.000000e+00> : vector<32x128xf32>
    %64 = tpu.matmul %61, %63, %cst_92 {dimension_numbers = #tpu.dot_dimension_numbers<[1], [0], [0], [1], [0, 0, 1, 1], [], []>} : vector<32x384xf32>, vector<384x128xf32>, vector<32x128xf32> -> vector<32x128xf32>
    %c1_93 = arith.constant 1 : index
    %c0_94 = arith.constant 0 : index
    %c0_95 = arith.constant 0 : index
    %65 = vector.load %arg3[%c1_93, %c0_94, %c0_95] : memref<3x1x128xf32, #tpu.memory_space<vmem>>, vector<1x1x128xf32>
    %66 = vector.shape_cast %65 : vector<1x1x128xf32> to vector<1x128xf32>
    %67 = vector.broadcast %66 : vector<1x128xf32> to vector<32x128xf32>
    %68 = arith.addf %64, %67 : vector<32x128xf32>
    %cst_96 = arith.constant 0.000000e+00 : f32
    %69 = vector.broadcast %cst_96 : f32 to vector<32x128xf32>
    %70 = arith.maximumf %68, %69 : vector<32x128xf32>
    %71 = vector.extract_strided_slice %70 {offsets = [0, 0], sizes = [16, 128], strides = [1, 1]} : vector<32x128xf32> to vector<16x128xf32>
    %c0_97 = arith.constant 0 : index
    %c1_98 = arith.constant 1 : index
    %c0_99 = arith.constant 0 : index
    %72 = vector.load %arg5[%c0_97, %c1_98, %c0_99] : memref<2x18x128xf32, #tpu.memory_space<vmem>>, vector<1x16x128xf32>
    %73 = vector.shape_cast %72 : vector<1x16x128xf32> to vector<16x128xf32>
    %74 = vector.shape_cast %71 : vector<16x128xf32> to vector<1x16x128xf32>
    tpu.vector_store %arg5[%c0_97, %c1_98, %c0_99], %74 {strides = array<i32>} : memref<2x18x128xf32, #tpu.memory_space<vmem>>, vector<1x16x128xf32>,
    %75 = vector.extract_strided_slice %70 {offsets = [16, 0], sizes = [16, 128], strides = [1, 1]} : vector<32x128xf32> to vector<16x128xf32>
    %c1_100 = arith.constant 1 : index
    %c1_101 = arith.constant 1 : index
    %c0_102 = arith.constant 0 : index
    %76 = vector.load %arg5[%c1_100, %c1_101, %c0_102] : memref<2x18x128xf32, #tpu.memory_space<vmem>>, vector<1x16x128xf32>
    %77 = vector.shape_cast %76 : vector<1x16x128xf32> to vector<16x128xf32>
    %78 = vector.shape_cast %75 : vector<16x128xf32> to vector<1x16x128xf32>
    tpu.vector_store %arg5[%c1_100, %c1_101, %c0_102], %78 {strides = array<i32>} : memref<2x18x128xf32, #tpu.memory_space<vmem>>, vector<1x16x128xf32>,
    %c0_103 = arith.constant 0 : index
    %c0_104 = arith.constant 0 : index
    %c0_105 = arith.constant 0 : index
    %79 = vector.load %arg5[%c0_103, %c0_104, %c0_105] : memref<2x18x128xf32, #tpu.memory_space<vmem>>, vector<1x16x128xf32>
    %80 = vector.shape_cast %79 : vector<1x16x128xf32> to vector<16x128xf32>
    %c0_106 = arith.constant 0 : index
    %c0_107 = arith.constant 0 : index
    %81 = vector.load %arg7[%c0_106, %c0_107] : memref<32x384xf32, #tpu.memory_space<vmem>>, vector<16x128xf32>
    tpu.vector_store %arg7[%c0_106, %c0_107], %80 {strides = array<i32>} : memref<32x384xf32, #tpu.memory_space<vmem>>, vector<16x128xf32>,
    %c0_108 = arith.constant 0 : index
    %c1_109 = arith.constant 1 : index
    %c0_110 = arith.constant 0 : index
    %82 = vector.load %arg5[%c0_108, %c1_109, %c0_110] : memref<2x18x128xf32, #tpu.memory_space<vmem>>, vector<1x16x128xf32>
    %83 = vector.shape_cast %82 : vector<1x16x128xf32> to vector<16x128xf32>
    %c0_111 = arith.constant 0 : index
    %c128_112 = arith.constant 128 : index
    %84 = vector.load %arg7[%c0_111, %c128_112] : memref<32x384xf32, #tpu.memory_space<vmem>>, vector<16x128xf32>
    tpu.vector_store %arg7[%c0_111, %c128_112], %83 {strides = array<i32>} : memref<32x384xf32, #tpu.memory_space<vmem>>, vector<16x128xf32>,
    %c0_113 = arith.constant 0 : index
    %c2_114 = arith.constant 2 : index
    %c0_115 = arith.constant 0 : index
    %85 = vector.load %arg5[%c0_113, %c2_114, %c0_115] : memref<2x18x128xf32, #tpu.memory_space<vmem>>, vector<1x16x128xf32>
    %86 = vector.shape_cast %85 : vector<1x16x128xf32> to vector<16x128xf32>
    %c0_116 = arith.constant 0 : index
    %c256_117 = arith.constant 256 : index
    %87 = vector.load %arg7[%c0_116, %c256_117] : memref<32x384xf32, #tpu.memory_space<vmem>>, vector<16x128xf32>
    tpu.vector_store %arg7[%c0_116, %c256_117], %86 {strides = array<i32>} : memref<32x384xf32, #tpu.memory_space<vmem>>, vector<16x128xf32>,
    %c1_118 = arith.constant 1 : index
    %c0_119 = arith.constant 0 : index
    %c0_120 = arith.constant 0 : index
    %88 = vector.load %arg5[%c1_118, %c0_119, %c0_120] : memref<2x18x128xf32, #tpu.memory_space<vmem>>, vector<1x16x128xf32>
    %89 = vector.shape_cast %88 : vector<1x16x128xf32> to vector<16x128xf32>
    %c16_121 = arith.constant 16 : index
    %c0_122 = arith.constant 0 : index
    %90 = vector.load %arg7[%c16_121, %c0_122] : memref<32x384xf32, #tpu.memory_space<vmem>>, vector<16x128xf32>
    tpu.vector_store %arg7[%c16_121, %c0_122], %89 {strides = array<i32>} : memref<32x384xf32, #tpu.memory_space<vmem>>, vector<16x128xf32>,
    %c1_123 = arith.constant 1 : index
    %c1_124 = arith.constant 1 : index
    %c0_125 = arith.constant 0 : index
    %91 = vector.load %arg5[%c1_123, %c1_124, %c0_125] : memref<2x18x128xf32, #tpu.memory_space<vmem>>, vector<1x16x128xf32>
    %92 = vector.shape_cast %91 : vector<1x16x128xf32> to vector<16x128xf32>
    %c16_126 = arith.constant 16 : index
    %c128_127 = arith.constant 128 : index
    %93 = vector.load %arg7[%c16_126, %c128_127] : memref<32x384xf32, #tpu.memory_space<vmem>>, vector<16x128xf32>
    tpu.vector_store %arg7[%c16_126, %c128_127], %92 {strides = array<i32>} : memref<32x384xf32, #tpu.memory_space<vmem>>, vector<16x128xf32>,
    %c1_128 = arith.constant 1 : index
    %c2_129 = arith.constant 2 : index
    %c0_130 = arith.constant 0 : index
    %94 = vector.load %arg5[%c1_128, %c2_129, %c0_130] : memref<2x18x128xf32, #tpu.memory_space<vmem>>, vector<1x16x128xf32>
    %95 = vector.shape_cast %94 : vector<1x16x128xf32> to vector<16x128xf32>
    %c16_131 = arith.constant 16 : index
    %c256_132 = arith.constant 256 : index
    %96 = vector.load %arg7[%c16_131, %c256_132] : memref<32x384xf32, #tpu.memory_space<vmem>>, vector<16x128xf32>
    tpu.vector_store %arg7[%c16_131, %c256_132], %95 {strides = array<i32>} : memref<32x384xf32, #tpu.memory_space<vmem>>, vector<16x128xf32>,
    %c0_133 = arith.constant 0 : index
    %c0_134 = arith.constant 0 : index
    %97 = vector.load %arg7[%c0_133, %c0_134] : memref<32x384xf32, #tpu.memory_space<vmem>>, vector<32x384xf32>
    %c2_135 = arith.constant 2 : index
    %c0_136 = arith.constant 0 : index
    %c0_137 = arith.constant 0 : index
    %98 = vector.load %arg2[%c2_135, %c0_136, %c0_137] : memref<3x384x128xf32, #tpu.memory_space<vmem>>, vector<1x384x128xf32>
    %99 = vector.shape_cast %98 : vector<1x384x128xf32> to vector<384x128xf32>
    %cst_138 = arith.constant dense<0.000000e+00> : vector<32x128xf32>
    %100 = tpu.matmul %97, %99, %cst_138 {dimension_numbers = #tpu.dot_dimension_numbers<[1], [0], [0], [1], [0, 0, 1, 1], [], []>} : vector<32x384xf32>, vector<384x128xf32>, vector<32x128xf32> -> vector<32x128xf32>
    %c2_139 = arith.constant 2 : index
    %c0_140 = arith.constant 0 : index
    %c0_141 = arith.constant 0 : index
    %101 = vector.load %arg3[%c2_139, %c0_140, %c0_141] : memref<3x1x128xf32, #tpu.memory_space<vmem>>, vector<1x1x128xf32>
    %102 = vector.shape_cast %101 : vector<1x1x128xf32> to vector<1x128xf32>
    %103 = vector.broadcast %102 : vector<1x128xf32> to vector<32x128xf32>
    %104 = arith.addf %100, %103 : vector<32x128xf32>
    %105 = vector.extract_strided_slice %104 {offsets = [0, 0], sizes = [16, 128], strides = [1, 1]} : vector<32x128xf32> to vector<16x128xf32>
    %c0_142 = arith.constant 0 : index
    %c0_143 = arith.constant 0 : index
    %c0_144 = arith.constant 0 : index
    %106 = vector.load %arg4[%c0_142, %c0_143, %c0_144] : memref<2x16x128xf32, #tpu.memory_space<vmem>>, vector<1x16x128xf32>
    %107 = vector.shape_cast %106 : vector<1x16x128xf32> to vector<16x128xf32>
    %108 = vector.shape_cast %105 : vector<16x128xf32> to vector<1x16x128xf32>
    tpu.vector_store %arg4[%c0_142, %c0_143, %c0_144], %108 {strides = array<i32>} : memref<2x16x128xf32, #tpu.memory_space<vmem>>, vector<1x16x128xf32>,
    %109 = vector.extract_strided_slice %104 {offsets = [16, 0], sizes = [16, 128], strides = [1, 1]} : vector<32x128xf32> to vector<16x128xf32>
    %c1_145 = arith.constant 1 : index
    %c0_146 = arith.constant 0 : index
    %c0_147 = arith.constant 0 : index
    %110 = vector.load %arg4[%c1_145, %c0_146, %c0_147] : memref<2x16x128xf32, #tpu.memory_space<vmem>>, vector<1x16x128xf32>
    %111 = vector.shape_cast %110 : vector<1x16x128xf32> to vector<16x128xf32>
    %112 = vector.shape_cast %109 : vector<16x128xf32> to vector<1x16x128xf32>
    tpu.vector_store %arg4[%c1_145, %c0_146, %c0_147], %112 {strides = array<i32>} : memref<2x16x128xf32, #tpu.memory_space<vmem>>, vector<1x16x128xf32>,
    return
  }
  func.func @transform_0(%arg0: i32) -> (i32, i32, i32) {
    %c0_i32 = arith.constant 0 : i32
    %c0_i32_0 = arith.constant 0 : i32
    %c0_i32_1 = arith.constant 0 : i32
    return %arg0, %c0_i32, %c0_i32_0 : i32, i32, i32
  }
  func.func @transform_1(%arg0: i32) -> (i32, i32, i32) {
    %c0_i32 = arith.constant 0 : i32
    %c0_i32_0 = arith.constant 0 : i32
    %c0_i32_1 = arith.constant 0 : i32
    %c0_i32_2 = arith.constant 0 : i32
    return %c0_i32, %c0_i32_0, %c0_i32_1 : i32, i32, i32
  }
  func.func @transform_2(%arg0: i32) -> (i32, i32, i32) {
    %c0_i32 = arith.constant 0 : i32
    %c0_i32_0 = arith.constant 0 : i32
    %c0_i32_1 = arith.constant 0 : i32
    %c0_i32_2 = arith.constant 0 : i32
    return %c0_i32, %c0_i32_0, %c0_i32_1 : i32, i32, i32
  }
  func.func @transform_3(%arg0: i32) -> (i32, i32, i32) {
    %c0_i32 = arith.constant 0 : i32
    %c0_i32_0 = arith.constant 0 : i32
    %c0_i32_1 = arith.constant 0 : i32
    return %arg0, %c0_i32, %c0_i32_0 : i32, i32, i32
  }
}

module attributes {stable_mosaic.version = 11 : i64} {
  func.func @_fused_cnn_kernel(%arg0: i32, %arg1: memref<2x16x128xf32, #tpu.memory_space<vmem>>, %arg2: memref<3x384x128xf32, #tpu.memory_space<vmem>>, %arg3: memref<3x1x128xf32, #tpu.memory_space<vmem>>, %arg4: memref<2x16x128xf32, #tpu.memory_space<vmem>>, %arg5: memref<2x18x128xf32, #tpu.memory_space<vmem>>, %arg6: memref<2x18x128xf32, #tpu.memory_space<vmem>>, %arg7: memref<32x384xf32, #tpu.memory_space<vmem>>) attributes {dimension_semantics = [#tpu.dimension_semantics<parallel>], iteration_bounds = array<i64: 2>, scalar_prefetch = 0 : i64, scratch_operands = 3 : i64, tpu.core_type = #tpu.core_type<tc>, window_params = [{transform_indices = @transform_0, window_bounds = array<i64: 2, 16, 128>}, {pipeline_mode = #tpu.pipeline_mode<synchronous>, transform_indices = @transform_1, window_bounds = array<i64: 3, 384, 128>}, {pipeline_mode = #tpu.pipeline_mode<synchronous>, transform_indices = @transform_2, window_bounds = array<i64: 3, 1, 128>}, {transform_indices = @transform_3, window_bounds = array<i64: 2, 16, 128>}]} {
    %cst = arith.constant 0.000000e+00 : f32
    %0 = vector.broadcast %cst : f32 to vector<2x1x128xf32>
    %c0 = arith.constant 0 : index
    %c0_0 = arith.constant 0 : index
    %c0_1 = arith.constant 0 : index
    %1 = vector.load %arg5[%c0, %c0_0, %c0_1] : memref<2x18x128xf32, #tpu.memory_space<vmem>>, vector<2x1x128xf32>
    tpu.vector_store %arg5[%c0, %c0_0, %c0_1], %0 {strides = array<i32>} : memref<2x18x128xf32, #tpu.memory_space<vmem>>, vector<2x1x128xf32>,
    %c0_2 = arith.constant 0 : index
    %c17 = arith.constant 17 : index
    %c0_3 = arith.constant 0 : index
    %2 = vector.load %arg5[%c0_2, %c17, %c0_3] : memref<2x18x128xf32, #tpu.memory_space<vmem>>, vector<2x1x128xf32>
    tpu.vector_store %arg5[%c0_2, %c17, %c0_3], %0 {strides = array<i32>} : memref<2x18x128xf32, #tpu.memory_space<vmem>>, vector<2x1x128xf32>,
    %c0_4 = arith.constant 0 : index
    %c0_5 = arith.constant 0 : index
    %c0_6 = arith.constant 0 : index
    %3 = vector.load %arg6[%c0_4, %c0_5, %c0_6] : memref<2x18x128xf32, #tpu.memory_space<vmem>>, vector<2x1x128xf32>
    tpu.vector_store %arg6[%c0_4, %c0_5, %c0_6], %0 {strides = array<i32>} : memref<2x18x128xf32, #tpu.memory_space<vmem>>, vector<2x1x128xf32>,
    %c0_7 = arith.constant 0 : index
    %c17_8 = arith.constant 17 : index
    %c0_9 = arith.constant 0 : index
    %4 = vector.load %arg6[%c0_7, %c17_8, %c0_9] : memref<2x18x128xf32, #tpu.memory_space<vmem>>, vector<2x1x128xf32>
    tpu.vector_store %arg6[%c0_7, %c17_8, %c0_9], %0 {strides = array<i32>} : memref<2x18x128xf32, #tpu.memory_space<vmem>>, vector<2x1x128xf32>,
    %c0_10 = arith.constant 0 : index
    %c0_11 = arith.constant 0 : index
    %c0_12 = arith.constant 0 : index
    %5 = vector.load %arg1[%c0_10, %c0_11, %c0_12] : memref<2x16x128xf32, #tpu.memory_space<vmem>>, vector<2x16x128xf32>
    %c0_13 = arith.constant 0 : index
    %c1 = arith.constant 1 : index
    %c0_14 = arith.constant 0 : index
    %6 = vector.load %arg5[%c0_13, %c1, %c0_14] : memref<2x18x128xf32, #tpu.memory_space<vmem>>, vector<2x16x128xf32>
    tpu.vector_store %arg5[%c0_13, %c1, %c0_14], %5 {strides = array<i32>} : memref<2x18x128xf32, #tpu.memory_space<vmem>>, vector<2x16x128xf32>,
    %c0_15 = arith.constant 0 : index
    %c0_16 = arith.constant 0 : index
    %c0_17 = arith.constant 0 : index
    %7 = vector.load %arg5[%c0_15, %c0_16, %c0_17] : memref<2x18x128xf32, #tpu.memory_space<vmem>>, vector<1x16x128xf32>
    %8 = vector.shape_cast %7 : vector<1x16x128xf32> to vector<16x128xf32>
    %c0_18 = arith.constant 0 : index
    %c0_19 = arith.constant 0 : index
    %9 = vector.load %arg7[%c0_18, %c0_19] : memref<32x384xf32, #tpu.memory_space<vmem>>, vector<16x128xf32>
    tpu.vector_store %arg7[%c0_18, %c0_19], %8 {strides = array<i32>} : memref<32x384xf32, #tpu.memory_space<vmem>>, vector<16x128xf32>,
    %c0_20 = arith.constant 0 : index
    %c1_21 = arith.constant 1 : index
    %c0_22 = arith.constant 0 : index
    %10 = vector.load %arg5[%c0_20, %c1_21, %c0_22] : memref<2x18x128xf32, #tpu.memory_space<vmem>>, vector<1x16x128xf32>
    %11 = vector.shape_cast %10 : vector<1x16x128xf32> to vector<16x128xf32>
    %c0_23 = arith.constant 0 : index
    %c128 = arith.constant 128 : index
    %12 = vector.load %arg7[%c0_23, %c128] : memref<32x384xf32, #tpu.memory_space<vmem>>, vector<16x128xf32>
    tpu.vector_store %arg7[%c0_23, %c128], %11 {strides = array<i32>} : memref<32x384xf32, #tpu.memory_space<vmem>>, vector<16x128xf32>,
    %c0_24 = arith.constant 0 : index
    %c2 = arith.constant 2 : index
    %c0_25 = arith.constant 0 : index
    %13 = vector.load %arg5[%c0_24, %c2, %c0_25] : memref<2x18x128xf32, #tpu.memory_space<vmem>>, vector<1x16x128xf32>
    %14 = vector.shape_cast %13 : vector<1x16x128xf32> to vector<16x128xf32>
    %c0_26 = arith.constant 0 : index
    %c256 = arith.constant 256 : index
    %15 = vector.load %arg7[%c0_26, %c256] : memref<32x384xf32, #tpu.memory_space<vmem>>, vector<16x128xf32>
    tpu.vector_store %arg7[%c0_26, %c256], %14 {strides = array<i32>} : memref<32x384xf32, #tpu.memory_space<vmem>>, vector<16x128xf32>,
    %c1_27 = arith.constant 1 : index
    %c0_28 = arith.constant 0 : index
    %c0_29 = arith.constant 0 : index
    %16 = vector.load %arg5[%c1_27, %c0_28, %c0_29] : memref<2x18x128xf32, #tpu.memory_space<vmem>>, vector<1x16x128xf32>
    %17 = vector.shape_cast %16 : vector<1x16x128xf32> to vector<16x128xf32>
    %c16 = arith.constant 16 : index
    %c0_30 = arith.constant 0 : index
    %18 = vector.load %arg7[%c16, %c0_30] : memref<32x384xf32, #tpu.memory_space<vmem>>, vector<16x128xf32>
    tpu.vector_store %arg7[%c16, %c0_30], %17 {strides = array<i32>} : memref<32x384xf32, #tpu.memory_space<vmem>>, vector<16x128xf32>,
    %c1_31 = arith.constant 1 : index
    %c1_32 = arith.constant 1 : index
    %c0_33 = arith.constant 0 : index
    %19 = vector.load %arg5[%c1_31, %c1_32, %c0_33] : memref<2x18x128xf32, #tpu.memory_space<vmem>>, vector<1x16x128xf32>
    %20 = vector.shape_cast %19 : vector<1x16x128xf32> to vector<16x128xf32>
    %c16_34 = arith.constant 16 : index
    %c128_35 = arith.constant 128 : index
    %21 = vector.load %arg7[%c16_34, %c128_35] : memref<32x384xf32, #tpu.memory_space<vmem>>, vector<16x128xf32>
    tpu.vector_store %arg7[%c16_34, %c128_35], %20 {strides = array<i32>} : memref<32x384xf32, #tpu.memory_space<vmem>>, vector<16x128xf32>,
    %c1_36 = arith.constant 1 : index
    %c2_37 = arith.constant 2 : index
    %c0_38 = arith.constant 0 : index
    %22 = vector.load %arg5[%c1_36, %c2_37, %c0_38] : memref<2x18x128xf32, #tpu.memory_space<vmem>>, vector<1x16x128xf32>
    %23 = vector.shape_cast %22 : vector<1x16x128xf32> to vector<16x128xf32>
    %c16_39 = arith.constant 16 : index
    %c256_40 = arith.constant 256 : index
    %24 = vector.load %arg7[%c16_39, %c256_40] : memref<32x384xf32, #tpu.memory_space<vmem>>, vector<16x128xf32>
    tpu.vector_store %arg7[%c16_39, %c256_40], %23 {strides = array<i32>} : memref<32x384xf32, #tpu.memory_space<vmem>>, vector<16x128xf32>,
    %c0_41 = arith.constant 0 : index
    %c0_42 = arith.constant 0 : index
    %25 = vector.load %arg7[%c0_41, %c0_42] : memref<32x384xf32, #tpu.memory_space<vmem>>, vector<32x384xf32>
    %c0_43 = arith.constant 0 : index
    %c0_44 = arith.constant 0 : index
    %c0_45 = arith.constant 0 : index
    %26 = vector.load %arg2[%c0_43, %c0_44, %c0_45] : memref<3x384x128xf32, #tpu.memory_space<vmem>>, vector<1x384x128xf32>
    %27 = vector.shape_cast %26 : vector<1x384x128xf32> to vector<384x128xf32>
    %cst_46 = arith.constant dense<0.000000e+00> : vector<32x128xf32>
    %28 = tpu.matmul %25, %27, %cst_46 {dimension_numbers = #tpu.dot_dimension_numbers<[1], [0], [0], [1], [0, 0, 1, 1], [], []>} : vector<32x384xf32>, vector<384x128xf32>, vector<32x128xf32> -> vector<32x128xf32>
    %c0_47 = arith.constant 0 : index
    %c0_48 = arith.constant 0 : index
    %c0_49 = arith.constant 0 : index
    %29 = vector.load %arg3[%c0_47, %c0_48, %c0_49] : memref<3x1x128xf32, #tpu.memory_space<vmem>>, vector<1x1x128xf32>
    %30 = vector.shape_cast %29 : vector<1x1x128xf32> to vector<1x128xf32>
    %31 = vector.broadcast %30 : vector<1x128xf32> to vector<32x128xf32>
    %32 = arith.addf %28, %31 : vector<32x128xf32>
    %cst_50 = arith.constant 0.000000e+00 : f32
    %33 = vector.broadcast %cst_50 : f32 to vector<32x128xf32>
    %34 = arith.maximumf %32, %33 : vector<32x128xf32>
    %35 = vector.extract_strided_slice %34 {offsets = [0, 0], sizes = [16, 128], strides = [1, 1]} : vector<32x128xf32> to vector<16x128xf32>
    %c0_51 = arith.constant 0 : index
    %c1_52 = arith.constant 1 : index
    %c0_53 = arith.constant 0 : index
    %36 = vector.load %arg6[%c0_51, %c1_52, %c0_53] : memref<2x18x128xf32, #tpu.memory_space<vmem>>, vector<1x16x128xf32>
    %37 = vector.shape_cast %36 : vector<1x16x128xf32> to vector<16x128xf32>
    %38 = vector.shape_cast %35 : vector<16x128xf32> to vector<1x16x128xf32>
    tpu.vector_store %arg6[%c0_51, %c1_52, %c0_53], %38 {strides = array<i32>} : memref<2x18x128xf32, #tpu.memory_space<vmem>>, vector<1x16x128xf32>,
    %39 = vector.extract_strided_slice %34 {offsets = [16, 0], sizes = [16, 128], strides = [1, 1]} : vector<32x128xf32> to vector<16x128xf32>
    %c1_54 = arith.constant 1 : index
    %c1_55 = arith.constant 1 : index
    %c0_56 = arith.constant 0 : index
    %40 = vector.load %arg6[%c1_54, %c1_55, %c0_56] : memref<2x18x128xf32, #tpu.memory_space<vmem>>, vector<1x16x128xf32>
    %41 = vector.shape_cast %40 : vector<1x16x128xf32> to vector<16x128xf32>
    %42 = vector.shape_cast %39 : vector<16x128xf32> to vector<1x16x128xf32>
    tpu.vector_store %arg6[%c1_54, %c1_55, %c0_56], %42 {strides = array<i32>} : memref<2x18x128xf32, #tpu.memory_space<vmem>>, vector<1x16x128xf32>,
    %c0_57 = arith.constant 0 : index
    %c0_58 = arith.constant 0 : index
    %c0_59 = arith.constant 0 : index
    %43 = vector.load %arg6[%c0_57, %c0_58, %c0_59] : memref<2x18x128xf32, #tpu.memory_space<vmem>>, vector<1x16x128xf32>
    %44 = vector.shape_cast %43 : vector<1x16x128xf32> to vector<16x128xf32>
    %c0_60 = arith.constant 0 : index
    %c0_61 = arith.constant 0 : index
    %45 = vector.load %arg7[%c0_60, %c0_61] : memref<32x384xf32, #tpu.memory_space<vmem>>, vector<16x128xf32>
    tpu.vector_store %arg7[%c0_60, %c0_61], %44 {strides = array<i32>} : memref<32x384xf32, #tpu.memory_space<vmem>>, vector<16x128xf32>,
    %c0_62 = arith.constant 0 : index
    %c1_63 = arith.constant 1 : index
    %c0_64 = arith.constant 0 : index
    %46 = vector.load %arg6[%c0_62, %c1_63, %c0_64] : memref<2x18x128xf32, #tpu.memory_space<vmem>>, vector<1x16x128xf32>
    %47 = vector.shape_cast %46 : vector<1x16x128xf32> to vector<16x128xf32>
    %c0_65 = arith.constant 0 : index
    %c128_66 = arith.constant 128 : index
    %48 = vector.load %arg7[%c0_65, %c128_66] : memref<32x384xf32, #tpu.memory_space<vmem>>, vector<16x128xf32>
    tpu.vector_store %arg7[%c0_65, %c128_66], %47 {strides = array<i32>} : memref<32x384xf32, #tpu.memory_space<vmem>>, vector<16x128xf32>,
    %c0_67 = arith.constant 0 : index
    %c2_68 = arith.constant 2 : index
    %c0_69 = arith.constant 0 : index
    %49 = vector.load %arg6[%c0_67, %c2_68, %c0_69] : memref<2x18x128xf32, #tpu.memory_space<vmem>>, vector<1x16x128xf32>
    %50 = vector.shape_cast %49 : vector<1x16x128xf32> to vector<16x128xf32>
    %c0_70 = arith.constant 0 : index
    %c256_71 = arith.constant 256 : index
    %51 = vector.load %arg7[%c0_70, %c256_71] : memref<32x384xf32, #tpu.memory_space<vmem>>, vector<16x128xf32>
    tpu.vector_store %arg7[%c0_70, %c256_71], %50 {strides = array<i32>} : memref<32x384xf32, #tpu.memory_space<vmem>>, vector<16x128xf32>,
    %c1_72 = arith.constant 1 : index
    %c0_73 = arith.constant 0 : index
    %c0_74 = arith.constant 0 : index
    %52 = vector.load %arg6[%c1_72, %c0_73, %c0_74] : memref<2x18x128xf32, #tpu.memory_space<vmem>>, vector<1x16x128xf32>
    %53 = vector.shape_cast %52 : vector<1x16x128xf32> to vector<16x128xf32>
    %c16_75 = arith.constant 16 : index
    %c0_76 = arith.constant 0 : index
    %54 = vector.load %arg7[%c16_75, %c0_76] : memref<32x384xf32, #tpu.memory_space<vmem>>, vector<16x128xf32>
    tpu.vector_store %arg7[%c16_75, %c0_76], %53 {strides = array<i32>} : memref<32x384xf32, #tpu.memory_space<vmem>>, vector<16x128xf32>,
    %c1_77 = arith.constant 1 : index
    %c1_78 = arith.constant 1 : index
    %c0_79 = arith.constant 0 : index
    %55 = vector.load %arg6[%c1_77, %c1_78, %c0_79] : memref<2x18x128xf32, #tpu.memory_space<vmem>>, vector<1x16x128xf32>
    %56 = vector.shape_cast %55 : vector<1x16x128xf32> to vector<16x128xf32>
    %c16_80 = arith.constant 16 : index
    %c128_81 = arith.constant 128 : index
    %57 = vector.load %arg7[%c16_80, %c128_81] : memref<32x384xf32, #tpu.memory_space<vmem>>, vector<16x128xf32>
    tpu.vector_store %arg7[%c16_80, %c128_81], %56 {strides = array<i32>} : memref<32x384xf32, #tpu.memory_space<vmem>>, vector<16x128xf32>,
    %c1_82 = arith.constant 1 : index
    %c2_83 = arith.constant 2 : index
    %c0_84 = arith.constant 0 : index
    %58 = vector.load %arg6[%c1_82, %c2_83, %c0_84] : memref<2x18x128xf32, #tpu.memory_space<vmem>>, vector<1x16x128xf32>
    %59 = vector.shape_cast %58 : vector<1x16x128xf32> to vector<16x128xf32>
    %c16_85 = arith.constant 16 : index
    %c256_86 = arith.constant 256 : index
    %60 = vector.load %arg7[%c16_85, %c256_86] : memref<32x384xf32, #tpu.memory_space<vmem>>, vector<16x128xf32>
    tpu.vector_store %arg7[%c16_85, %c256_86], %59 {strides = array<i32>} : memref<32x384xf32, #tpu.memory_space<vmem>>, vector<16x128xf32>,
    %c0_87 = arith.constant 0 : index
    %c0_88 = arith.constant 0 : index
    %61 = vector.load %arg7[%c0_87, %c0_88] : memref<32x384xf32, #tpu.memory_space<vmem>>, vector<32x384xf32>
    %c1_89 = arith.constant 1 : index
    %c0_90 = arith.constant 0 : index
    %c0_91 = arith.constant 0 : index
    %62 = vector.load %arg2[%c1_89, %c0_90, %c0_91] : memref<3x384x128xf32, #tpu.memory_space<vmem>>, vector<1x384x128xf32>
    %63 = vector.shape_cast %62 : vector<1x384x128xf32> to vector<384x128xf32>
    %cst_92 = arith.constant dense<0.000000e+00> : vector<32x128xf32>
    %64 = tpu.matmul %61, %63, %cst_92 {dimension_numbers = #tpu.dot_dimension_numbers<[1], [0], [0], [1], [0, 0, 1, 1], [], []>} : vector<32x384xf32>, vector<384x128xf32>, vector<32x128xf32> -> vector<32x128xf32>
    %c1_93 = arith.constant 1 : index
    %c0_94 = arith.constant 0 : index
    %c0_95 = arith.constant 0 : index
    %65 = vector.load %arg3[%c1_93, %c0_94, %c0_95] : memref<3x1x128xf32, #tpu.memory_space<vmem>>, vector<1x1x128xf32>
    %66 = vector.shape_cast %65 : vector<1x1x128xf32> to vector<1x128xf32>
    %67 = vector.broadcast %66 : vector<1x128xf32> to vector<32x128xf32>
    %68 = arith.addf %64, %67 : vector<32x128xf32>
    %cst_96 = arith.constant 0.000000e+00 : f32
    %69 = vector.broadcast %cst_96 : f32 to vector<32x128xf32>
    %70 = arith.maximumf %68, %69 : vector<32x128xf32>
    %71 = vector.extract_strided_slice %70 {offsets = [0, 0], sizes = [16, 128], strides = [1, 1]} : vector<32x128xf32> to vector<16x128xf32>
    %c0_97 = arith.constant 0 : index
    %c1_98 = arith.constant 1 : index
    %c0_99 = arith.constant 0 : index
    %72 = vector.load %arg5[%c0_97, %c1_98, %c0_99] : memref<2x18x128xf32, #tpu.memory_space<vmem>>, vector<1x16x128xf32>
    %73 = vector.shape_cast %72 : vector<1x16x128xf32> to vector<16x128xf32>
    %74 = vector.shape_cast %71 : vector<16x128xf32> to vector<1x16x128xf32>
    tpu.vector_store %arg5[%c0_97, %c1_98, %c0_99], %74 {strides = array<i32>} : memref<2x18x128xf32, #tpu.memory_space<vmem>>, vector<1x16x128xf32>,
    %75 = vector.extract_strided_slice %70 {offsets = [16, 0], sizes = [16, 128], strides = [1, 1]} : vector<32x128xf32> to vector<16x128xf32>
    %c1_100 = arith.constant 1 : index
    %c1_101 = arith.constant 1 : index
    %c0_102 = arith.constant 0 : index
    %76 = vector.load %arg5[%c1_100, %c1_101, %c0_102] : memref<2x18x128xf32, #tpu.memory_space<vmem>>, vector<1x16x128xf32>
    %77 = vector.shape_cast %76 : vector<1x16x128xf32> to vector<16x128xf32>
    %78 = vector.shape_cast %75 : vector<16x128xf32> to vector<1x16x128xf32>
    tpu.vector_store %arg5[%c1_100, %c1_101, %c0_102], %78 {strides = array<i32>} : memref<2x18x128xf32, #tpu.memory_space<vmem>>, vector<1x16x128xf32>,
    %c0_103 = arith.constant 0 : index
    %c0_104 = arith.constant 0 : index
    %c0_105 = arith.constant 0 : index
    %79 = vector.load %arg5[%c0_103, %c0_104, %c0_105] : memref<2x18x128xf32, #tpu.memory_space<vmem>>, vector<1x16x128xf32>
    %80 = vector.shape_cast %79 : vector<1x16x128xf32> to vector<16x128xf32>
    %c0_106 = arith.constant 0 : index
    %c0_107 = arith.constant 0 : index
    %81 = vector.load %arg7[%c0_106, %c0_107] : memref<32x384xf32, #tpu.memory_space<vmem>>, vector<16x128xf32>
    tpu.vector_store %arg7[%c0_106, %c0_107], %80 {strides = array<i32>} : memref<32x384xf32, #tpu.memory_space<vmem>>, vector<16x128xf32>,
    %c0_108 = arith.constant 0 : index
    %c1_109 = arith.constant 1 : index
    %c0_110 = arith.constant 0 : index
    %82 = vector.load %arg5[%c0_108, %c1_109, %c0_110] : memref<2x18x128xf32, #tpu.memory_space<vmem>>, vector<1x16x128xf32>
    %83 = vector.shape_cast %82 : vector<1x16x128xf32> to vector<16x128xf32>
    %c0_111 = arith.constant 0 : index
    %c128_112 = arith.constant 128 : index
    %84 = vector.load %arg7[%c0_111, %c128_112] : memref<32x384xf32, #tpu.memory_space<vmem>>, vector<16x128xf32>
    tpu.vector_store %arg7[%c0_111, %c128_112], %83 {strides = array<i32>} : memref<32x384xf32, #tpu.memory_space<vmem>>, vector<16x128xf32>,
    %c0_113 = arith.constant 0 : index
    %c2_114 = arith.constant 2 : index
    %c0_115 = arith.constant 0 : index
    %85 = vector.load %arg5[%c0_113, %c2_114, %c0_115] : memref<2x18x128xf32, #tpu.memory_space<vmem>>, vector<1x16x128xf32>
    %86 = vector.shape_cast %85 : vector<1x16x128xf32> to vector<16x128xf32>
    %c0_116 = arith.constant 0 : index
    %c256_117 = arith.constant 256 : index
    %87 = vector.load %arg7[%c0_116, %c256_117] : memref<32x384xf32, #tpu.memory_space<vmem>>, vector<16x128xf32>
    tpu.vector_store %arg7[%c0_116, %c256_117], %86 {strides = array<i32>} : memref<32x384xf32, #tpu.memory_space<vmem>>, vector<16x128xf32>,
    %c1_118 = arith.constant 1 : index
    %c0_119 = arith.constant 0 : index
    %c0_120 = arith.constant 0 : index
    %88 = vector.load %arg5[%c1_118, %c0_119, %c0_120] : memref<2x18x128xf32, #tpu.memory_space<vmem>>, vector<1x16x128xf32>
    %89 = vector.shape_cast %88 : vector<1x16x128xf32> to vector<16x128xf32>
    %c16_121 = arith.constant 16 : index
    %c0_122 = arith.constant 0 : index
    %90 = vector.load %arg7[%c16_121, %c0_122] : memref<32x384xf32, #tpu.memory_space<vmem>>, vector<16x128xf32>
    tpu.vector_store %arg7[%c16_121, %c0_122], %89 {strides = array<i32>} : memref<32x384xf32, #tpu.memory_space<vmem>>, vector<16x128xf32>,
    %c1_123 = arith.constant 1 : index
    %c1_124 = arith.constant 1 : index
    %c0_125 = arith.constant 0 : index
    %91 = vector.load %arg5[%c1_123, %c1_124, %c0_125] : memref<2x18x128xf32, #tpu.memory_space<vmem>>, vector<1x16x128xf32>
    %92 = vector.shape_cast %91 : vector<1x16x128xf32> to vector<16x128xf32>
    %c16_126 = arith.constant 16 : index
    %c128_127 = arith.constant 128 : index
    %93 = vector.load %arg7[%c16_126, %c128_127] : memref<32x384xf32, #tpu.memory_space<vmem>>, vector<16x128xf32>
    tpu.vector_store %arg7[%c16_126, %c128_127], %92 {strides = array<i32>} : memref<32x384xf32, #tpu.memory_space<vmem>>, vector<16x128xf32>,
    %c1_128 = arith.constant 1 : index
    %c2_129 = arith.constant 2 : index
    %c0_130 = arith.constant 0 : index
    %94 = vector.load %arg5[%c1_128, %c2_129, %c0_130] : memref<2x18x128xf32, #tpu.memory_space<vmem>>, vector<1x16x128xf32>
    %95 = vector.shape_cast %94 : vector<1x16x128xf32> to vector<16x128xf32>
    %c16_131 = arith.constant 16 : index
    %c256_132 = arith.constant 256 : index
    %96 = vector.load %arg7[%c16_131, %c256_132] : memref<32x384xf32, #tpu.memory_space<vmem>>, vector<16x128xf32>
    tpu.vector_store %arg7[%c16_131, %c256_132], %95 {strides = array<i32>} : memref<32x384xf32, #tpu.memory_space<vmem>>, vector<16x128xf32>,
    %c0_133 = arith.constant 0 : index
    %c0_134 = arith.constant 0 : index
    %97 = vector.load %arg7[%c0_133, %c0_134] : memref<32x384xf32, #tpu.memory_space<vmem>>, vector<32x384xf32>
    %c2_135 = arith.constant 2 : index
    %c0_136 = arith.constant 0 : index
    %c0_137 = arith.constant 0 : index
    %98 = vector.load %arg2[%c2_135, %c0_136, %c0_137] : memref<3x384x128xf32, #tpu.memory_space<vmem>>, vector<1x384x128xf32>
    %99 = vector.shape_cast %98 : vector<1x384x128xf32> to vector<384x128xf32>
    %cst_138 = arith.constant dense<0.000000e+00> : vector<32x128xf32>
    %100 = tpu.matmul %97, %99, %cst_138 {dimension_numbers = #tpu.dot_dimension_numbers<[1], [0], [0], [1], [0, 0, 1, 1], [], []>} : vector<32x384xf32>, vector<384x128xf32>, vector<32x128xf32> -> vector<32x128xf32>
    %c2_139 = arith.constant 2 : index
    %c0_140 = arith.constant 0 : index
    %c0_141 = arith.constant 0 : index
    %101 = vector.load %arg3[%c2_139, %c0_140, %c0_141] : memref<3x1x128xf32, #tpu.memory_space<vmem>>, vector<1x1x128xf32>
    %102 = vector.shape_cast %101 : vector<1x1x128xf32> to vector<1x128xf32>
    %103 = vector.broadcast %102 : vector<1x128xf32> to vector<32x128xf32>
    %104 = arith.addf %100, %103 : vector<32x128xf32>
    %105 = vector.extract_strided_slice %104 {offsets = [0, 0], sizes = [16, 128], strides = [1, 1]} : vector<32x128xf32> to vector<16x128xf32>
    %c0_142 = arith.constant 0 : index
    %c0_143 = arith.constant 0 : index
    %c0_144 = arith.constant 0 : index
    %106 = vector.load %arg4[%c0_142, %c0_143, %c0_144] : memref<2x16x128xf32, #tpu.memory_space<vmem>>, vector<1x16x128xf32>
    %107 = vector.shape_cast %106 : vector<1x16x128xf32> to vector<16x128xf32>
    %108 = vector.shape_cast %105 : vector<16x128xf32> to vector<1x16x128xf32>
    tpu.vector_store %arg4[%c0_142, %c0_143, %c0_144], %108 {strides = array<i32>} : memref<2x16x128xf32, #tpu.memory_space<vmem>>, vector<1x16x128xf32>,
    %109 = vector.extract_strided_slice %104 {offsets = [16, 0], sizes = [16, 128], strides = [1, 1]} : vector<32x128xf32> to vector<16x128xf32>
    %c1_145 = arith.constant 1 : index
    %c0_146 = arith.constant 0 : index
    %c0_147 = arith.constant 0 : index
    %110 = vector.load %arg4[%c1_145, %c0_146, %c0_147] : memref<2x16x128xf32, #tpu.memory_space<vmem>>, vector<1x16x128xf32>
    %111 = vector.shape_cast %110 : vector<1x16x128xf32> to vector<16x128xf32>
    %112 = vector.shape_cast %109 : vector<16x128xf32> to vector<1x16x128xf32>
    tpu.vector_store %arg4[%c1_145, %c0_146, %c0_147], %112 {strides = array<i32>} : memref<2x16x128xf32, #tpu.memory_space<vmem>>, vector<1x16x128xf32>,
    return
  }
  func.func @transform_0(%arg0: i32) -> (i32, i32, i32) {
    %c0_i32 = arith.constant 0 : i32
    %c0_i32_0 = arith.constant 0 : i32
    %c0_i32_1 = arith.constant 0 : i32
    return %arg0, %c0_i32, %c0_i32_0 : i32, i32, i32
  }
  func.func @transform_1(%arg0: i32) -> (i32, i32, i32) {
    %c0_i32 = arith.constant 0 : i32
    %c0_i32_0 = arith.constant 0 : i32
    %c0_i32_1 = arith.constant 0 : i32
    %c0_i32_2 = arith.constant 0 : i32
    return %c0_i32, %c0_i32_0, %c0_i32_1 : i32, i32, i32
  }
  func.func @transform_2(%arg0: i32) -> (i32, i32, i32) {
    %c0_i32 = arith.constant 0 : i32
    %c0_i32_0 = arith.constant 0 : i32
    %c0_i32_1 = arith.constant 0 : i32
    %c0_i32_2 = arith.constant 0 : i32
    return %c0_i32, %c0_i32_0, %c0_i32_1 : i32, i32, i32
  }
  func.func @transform_3(%arg0: i32) -> (i32, i32, i32) {
    %c0_i32 = arith.constant 0 : i32
    %c0_i32_0 = arith.constant 0 : i32
    %c0_i32_1 = arith.constant 0 : i32
    return %arg0, %c0_i32, %c0_i32_0 : i32, i32, i32
  }
}

</mosaic_0001>

<llo_original>
// kernel: tpu_custom_call.1
$region0: #{tpu_custom_call.1}
  #allocation0 [shape = 'u32[]', space=smem, size = 0x4, offset = 0x4, fixed_abs, tag = 'smem constant byte address 0x4 - core index']
  #allocation1 [shape = 'u32[72,128]{1,0:T(1,128)}', space=vmem, size = 0x9000, scoped, tag = 'internal scratch']
  #allocation2 [shape = 'f32[2,18,128]{2,1,0:T(8,128)}', space=vmem, size = 0x6000, scoped, tag = 'scratch operand']
  #allocation3 [shape = 'f32[2,18,128]{2,1,0:T(8,128)}', space=vmem, size = 0x6000, scoped, tag = 'scratch operand']
  #allocation4 [shape = 'f32[32,384]{1,0:T(8,128)}', space=vmem, size = 0xc000, scoped, tag = 'scratch operand']
  %s0 = inlined_call_operand.hbm [shape: f32[4,16,128], index: 0, kind: input, shape index: {}]
  %s1 = inlined_call_operand.hbm [shape: f32[3,384,128], index: 1, kind: input, shape index: {}]
  %s2 = inlined_call_operand.hbm [shape: f32[3,1,128], index: 2, kind: input, shape index: {}]
  %s3 = inlined_call_operand.hbm [shape: f32[4,16,128], index: 3, kind: output, shape index: {}]
  %s4 = sld [smem:[#allocation0]]
  $region57: #{tpu_custom_call.1} parent=0
    _
  %s6 = ssub.s32 1, %s4
  %s7 = scalar_select 0, %s6, %s4
  $region1: #{tpu_custom_call.1} parent=0
    #allocation5 [shape = 'u8[32768]{0}', space=vmem, size = 0x8000, scoped, tag = 'input window, operand 0']
    #allocation6 [shape = 's32[2]{0}', space=sflag, size = 0x8, scoped, tag = 'scoped memory for tpu_custom_call.1']
    #allocation7 [shape = 's32[2]{0}', space=sflag, size = 0x8, scoped, tag = 'scoped memory for tpu_custom_call.1']
    #allocation8 [shape = 'u8[589824]{0}', space=vmem, size = 0x90000, scoped, tag = 'input window, operand 1, single buffered']
    #allocation9 [shape = 's32[1]{0}', space=sflag, size = 0x4, scoped, tag = 'scoped memory for tpu_custom_call.1']
    #allocation10 [shape = 'u8[1536]{0}', space=vmem, size = 0x800, scoped, tag = 'input window, operand 2, single buffered']
    #allocation11 [shape = 'u8[32768]{0}', space=vmem, size = 0x8000, scoped, tag = 'output window, operand 0']
    %8 = vsyncpa [#allocation6], 0
    %s9 = scalar_lea.sflag [#allocation6], 1
    %10 = vsyncpa %s9, 0
    %11 = vsyncpa [#allocation9], 0
    %12 = vsyncpa [#allocation7], 0
    %s13 = scalar_lea.sflag [#allocation7], 1
    %14 = vsyncpa %s13, 0
    loop: start=0, step=1, limit=4
    $region2: #{tpu_custom_call.1} parent=1 // loop_pre_header
      _
    $region3: #{tpu_custom_call.1} parent=1 // loop_header
      %s16 = sphi 0, %s20
      %p17 = scmp.ge.s32.totalorder %s16, 4
      %s26 = sphi 0, %s28
      %s29 = sphi 0, %s26
      %s30 = sphi 0, %s29
      %s46 = sphi 0, %s30
      %s50 = sphi 0, %s50
      %s52 = sphi 0, %s50
      %s53 = sphi 0, %s52
      %s67 = sphi 0, %s53
      %s71 = sphi 0, %s71
      %s73 = sphi 0, %s71
      %s74 = sphi 0, %s73
      %s88 = sphi 0, %s74
      %s94 = sphi 0, %s96
      %s97 = sphi 0, %s94
      %s98 = sphi 0, %s97
      %s114 = sphi 0, %s98
    $region4: #{tpu_custom_call.1} parent=1 // loop_header_branch
      %19 = sbr.rel (%p17) target = $region8
    $region5: #{tpu_custom_call.1} parent=1 // loop_body
      %s21 = ssub.s32 %s16, 1
      %s22 = ssub.s32 %s16, 2
      %s23 = sadd.s32 %s16, 1
      %s24 = ssub.s32 %s16, %s23
      %p25 = scmp.eq.s32.totalorder %s24, 0
      %s27 = sadd.s32 %s26, 1
      %s28 = scalar_select %p25, %s26, %s27
      %p31 = pneg %p25
      %p32 = scmp.eq.s32.totalorder %s16, 1
      %p33 = por %p31, %p32
      %p34 = scmp.ne.s32.totalorder %s26, %s29
      %p35 = scmp.eq.s32.totalorder %s16, 0
      %p36 = por %p34, %p35
      %p37 = scmp.ne.s32.totalorder %s26, %s29
      %p38 = scmp.eq.s32.totalorder %s21, 1
      %p39 = por %p37, %p38
      %p40 = scmp.ne.s32.totalorder %s29, %s30
      %p41 = scmp.eq.s32.totalorder %s21, 0
      %p42 = por %p40, %p41
      %p43 = scmp.ne.s32.totalorder %s29, %s30
      %p44 = scmp.eq.s32.totalorder %s22, 1
      %p45 = por %p43, %p44
      %p47 = scmp.ne.s32.totalorder %s30, %s46
      %p48 = scmp.eq.s32.totalorder %s22, 0
      %p49 = por %p47, %p48
      %s51 = sadd.s32 %s50, 1
      %p54 = scmp.eq.s32.totalorder %s16, 1
      %p55 = scmp.ne.s32.totalorder %s50, %s52
      %p56 = scmp.eq.s32.totalorder %s16, 0
      %p57 = por %p55, %p56
      %p58 = scmp.ne.s32.totalorder %s50, %s52
      %p59 = scmp.eq.s32.totalorder %s21, 1
      %p60 = por %p58, %p59
      %p61 = scmp.ne.s32.totalorder %s52, %s53
      %p62 = scmp.eq.s32.totalorder %s21, 0
      %p63 = por %p61, %p62
      %p64 = scmp.ne.s32.totalorder %s52, %s53
      %p65 = scmp.eq.s32.totalorder %s22, 1
      %p66 = por %p64, %p65
      %p68 = scmp.ne.s32.totalorder %s53, %s67
      %p69 = scmp.eq.s32.totalorder %s22, 0
      %p70 = por %p68, %p69
      %s72 = sadd.s32 %s71, 1
      %p75 = scmp.eq.s32.totalorder %s16, 1
      %p76 = scmp.ne.s32.totalorder %s71, %s73
      %p77 = scmp.eq.s32.totalorder %s16, 0
      %p78 = por %p76, %p77
      %p79 = scmp.ne.s32.totalorder %s71, %s73
      %p80 = scmp.eq.s32.totalorder %s21, 1
      %p81 = por %p79, %p80
      %p82 = scmp.ne.s32.totalorder %s73, %s74
      %p83 = scmp.eq.s32.totalorder %s21, 0
      %p84 = por %p82, %p83
      %p85 = scmp.ne.s32.totalorder %s73, %s74
      %p86 = scmp.eq.s32.totalorder %s22, 1
      %p87 = por %p85, %p86
      %p89 = scmp.ne.s32.totalorder %s74, %s88
      %p90 = scmp.eq.s32.totalorder %s22, 0
      %p91 = por %p89, %p90
      %s92 = ssub.s32 %s16, %s23
      %p93 = scmp.eq.s32.totalorder %s92, 0
      %s95 = sadd.s32 %s94, 1
      %s96 = scalar_select %p93, %s94, %s95
      %p99 = pneg %p93
      %p100 = scmp.eq.s32.totalorder %s16, 1
      %p101 = por %p99, %p100
      %p102 = scmp.ne.s32.totalorder %s94, %s97
      %p103 = scmp.eq.s32.totalorder %s16, 0
      %p104 = por %p102, %p103
      %p105 = scmp.ne.s32.totalorder %s94, %s97
      %p106 = scmp.eq.s32.totalorder %s21, 1
      %p107 = por %p105, %p106
      %p108 = scmp.ne.s32.totalorder %s97, %s98
      %p109 = scmp.eq.s32.totalorder %s21, 0
      %p110 = por %p108, %p109
      %p111 = scmp.ne.s32.totalorder %s97, %s98
      %p112 = scmp.eq.s32.totalorder %s22, 1
      %p113 = por %p111, %p112
      %p115 = scmp.ne.s32.totalorder %s98, %s114
      %p116 = scmp.eq.s32.totalorder %s22, 0
      %p117 = por %p115, %p116
      %p118 = scmp.le.s32.totalorder 1, %s16
      %p119 = scmp.lt.s32.totalorder %s16, 3
      %p120 = pnand %p118, %p119
      %p121 = pneg %p120
      // Predicated region
      $region9: #{tpu_custom_call.1} parent=5 // pred_check
        _
      $region10: #{tpu_custom_call.1} parent=5 // pred_check_branch
        %123 = sbr.rel (%p120) target = $region12
      $region11: #{tpu_custom_call.1} parent=5 // pred_region
        %s124 = ssub.s32 %s16, 1
        // Predicated region
        $region13: #{tpu_custom_call.1} parent=11 // pred_check
          %p125 = pneg %p63
        $region14: #{tpu_custom_call.1} parent=11 // pred_check_branch
          %127 = sbr.rel (%p125) target = $region16
        $region15: #{tpu_custom_call.1} parent=11 // pred_region
          %129 = vsyncadd [#allocation9], 0
          %s130 = sshll.u32 %s1, 4
          %s131 = int_to_ptr.hbm [resolvable:$true] %s130
          %s132 = sshll.u32 [#allocation8], 4
          %s133 = int_to_ptr.vmem [resolvable:$true] %s132
          %138 = dma.hbm_to_vmem [thread:$0]  %s131, 18432, %s133, [#allocation9], 128, 128, 8
        $region16: #{tpu_custom_call.1} parent=11 // pred_fallthru
          _
        // Predicated region
        $region17: #{tpu_custom_call.1} parent=11 // pred_check
          %p139 = pneg %p84
        $region18: #{tpu_custom_call.1} parent=11 // pred_check_branch
          %141 = sbr.rel (%p139) target = $region20
        $region19: #{tpu_custom_call.1} parent=11 // pred_region
          %143 = vsyncadd [#allocation9], 0
          %s144 = sshll.u32 %s2, 4
          %s145 = int_to_ptr.hbm [resolvable:$true] %s144
          %s146 = sshll.u32 [#allocation10], 4
          %s147 = int_to_ptr.vmem [resolvable:$true] %s146
          %152 = dma.hbm_to_vmem [thread:$0]  %s145, 48, %s147, [#allocation9], 16, 16, 1
        $region20: #{tpu_custom_call.1} parent=11 // pred_fallthru
          _
      $region12: #{tpu_custom_call.1} parent=5 // pred_fallthru
        _
      %p153 = scmp.lt.s32.totalorder %s16, 2
      // Predicated region
      $region21: #{tpu_custom_call.1} parent=5 // pred_check
        %p154 = pneg %p153
      $region22: #{tpu_custom_call.1} parent=5 // pred_check_branch
        %156 = sbr.rel (%p154) target = $region24
      $region23: #{tpu_custom_call.1} parent=5 // pred_region
        // Predicated region
        $region25: #{tpu_custom_call.1} parent=23 // pred_check
          %p157 = pneg %p36
        $region26: #{tpu_custom_call.1} parent=23 // pred_check_branch
          %159 = sbr.rel (%p157) target = $region28
        $region27: #{tpu_custom_call.1} parent=23 // pred_region
          %s160 = sand.u32 %s26, 1
          %s161 = scalar_lea.sflag [#allocation6], %s160
          %s162 = sand.u32 %s26, 1
          %s163 = smul.addr %s162, 32
          %s164 = scalar_lea.vmem [#allocation5], %s163
          %s165 = smul.u32 2, %s16
          %167 = vsyncadd %s161, 0
          %s168 = smul.addr %s165, 2
          %s169 = smul.addr %s168, 8
          %s170 = scalar_lea.hbm %s0, %s169
          %s171 = sshll.u32 %s170, 4
          %s172 = int_to_ptr.hbm [resolvable:$true] %s171
          %s173 = sshll.u32 %s164, 4
          %s174 = int_to_ptr.vmem [resolvable:$true] %s173
          %179 = dma.hbm_to_vmem [thread:$0]  %s172, 512, %s174, %s161, 128, 128, 8
        $region28: #{tpu_custom_call.1} parent=23 // pred_fallthru
          _
      $region24: #{tpu_custom_call.1} parent=5 // pred_fallthru
        _
      %p180 = scmp.le.s32.totalorder 1, %s16
      %p181 = scmp.lt.s32.totalorder %s16, 3
      %p182 = pnand %p180, %p181
      %p183 = pneg %p182
      // Predicated region
      $region29: #{tpu_custom_call.1} parent=5 // pred_check
        _
      $region30: #{tpu_custom_call.1} parent=5 // pred_check_branch
        %185 = sbr.rel (%p182) target = $region32
      $region31: #{tpu_custom_call.1} parent=5 // pred_region
        %s186 = ssub.s32 %s16, 1
        %s187 = sand.u32 %s29, 1
        %s188 = scalar_lea.sflag [#allocation6], %s187
        %s189 = sand.u32 %s29, 1
        %s190 = smul.addr %s189, 32
        %s191 = scalar_lea.vmem [#allocation5], %s190
        // Predicated region
        $region33: #{tpu_custom_call.1} parent=31 // pred_check
          %p192 = pneg %p42
        $region34: #{tpu_custom_call.1} parent=31 // pred_check_branch
          %194 = sbr.rel (%p192) target = $region36
        $region35: #{tpu_custom_call.1} parent=31 // pred_region
          %196 = dma.done %s188, 512
        $region36: #{tpu_custom_call.1} parent=31 // pred_fallthru
          _
        // Predicated region
        $region37: #{tpu_custom_call.1} parent=31 // pred_check
          %p197 = pneg %p63
        $region38: #{tpu_custom_call.1} parent=31 // pred_check_branch
          %199 = sbr.rel (%p197) target = $region40
        $region39: #{tpu_custom_call.1} parent=31 // pred_region
          %201 = dma.done [#allocation9], 18432
        $region40: #{tpu_custom_call.1} parent=31 // pred_fallthru
          _
        // Predicated region
        $region41: #{tpu_custom_call.1} parent=31 // pred_check
          %p202 = pneg %p84
        $region42: #{tpu_custom_call.1} parent=31 // pred_check_branch
          %204 = sbr.rel (%p202) target = $region44
        $region43: #{tpu_custom_call.1} parent=31 // pred_region
          %206 = dma.done [#allocation9], 48
        $region44: #{tpu_custom_call.1} parent=31 // pred_fallthru
          _
        %s207 = sand.u32 %s29, 1
        %s208 = scalar_lea.sflag [#allocation6], %s207
        %s209 = sand.u32 %s29, 1
        %s210 = smul.addr %s209, 32
        %s211 = scalar_lea.vmem [#allocation5], %s210
        %p212 = pneg %p42
        %p213 = pneg %p39
        %p214 = pneg %p63
        %p215 = pneg %p60
        %p216 = pneg %p84
        %p217 = pneg %p81
        %p218 = pneg %p110
        %p219 = pneg %p107
        %s220 = sand.u32 %s97, 1
        %s221 = scalar_lea.sflag [#allocation7], %s220
        %s222 = sand.u32 %s97, 1
        %s223 = smul.addr %s222, 32
        %s224 = scalar_lea.vmem [#allocation11], %s223
        %s225 = smul.u32 2, %s21
        %s226 = smul.u32 2, %s21
        %227 = vst [vmem:[#allocation2] sm:$0x1] 0.0
        %228 = vst [vmem:[#allocation2 + $0x18] sm:$0x1] 0.0
        %229 = vst [vmem:[#allocation2 + $0x11] sm:$0x1] 0.0
        %230 = vst [vmem:[#allocation2 + $0x29] sm:$0x1] 0.0
        %231 = vst [vmem:[#allocation3] sm:$0x1] 0.0
        %232 = vst [vmem:[#allocation3 + $0x18] sm:$0x1] 0.0
        %233 = vst [vmem:[#allocation3 + $0x11] sm:$0x1] 0.0
        %234 = vst [vmem:[#allocation3 + $0x29] sm:$0x1] 0.0
        %v235 = vld [vmem:[%s191] sm:$0xff]
        %v236 = vld [vmem:[%s191 + $0x8] sm:$0xff]
        %v237 = vld [vmem:[%s191 + $0x10] sm:$0xff]
        %v238 = vld [vmem:[%s191 + $0x18] sm:$0xff]
        %239 = vst [vmem:[#allocation2 + $0x1] sm:$0xff] %v235
        %240 = vst [vmem:[#allocation2 + $0x9] sm:$0xff] %v236
        %241 = vst [vmem:[#allocation2 + $0x19] sm:$0xff] %v237
        %242 = vst [vmem:[#allocation2 + $0x21] sm:$0xff] %v238
        %v243 = vld [vmem:[#allocation2] sm:$0xff]
        %v244 = vld [vmem:[#allocation2 + $0x8] sm:$0xff]
        %245 = vst [vmem:[#allocation4] sm:$0xff] %v243
        %246 = vst [vmem:[#allocation4 + $0x18] sm:$0xff] %v244
        %v247 = vld [vmem:[#allocation2 + $0x1] sm:$0xff]
        %v248 = vld [vmem:[#allocation2 + $0x9] sm:$0xff]
        %249 = vst [vmem:[#allocation4 + $0x8] sm:$0xff] %v247
        %250 = vst [vmem:[#allocation4 + $0x20] sm:$0xff] %v248
        %v251 = vld [vmem:[#allocation2 + $0x2] sm:$0xff]
        %v252 = vld [vmem:[#allocation2 + $0xa] sm:$0xff]
        %253 = vst [vmem:[#allocation4 + $0x10] sm:$0xff] %v251
        %254 = vst [vmem:[#allocation4 + $0x28] sm:$0xff] %v252
        %s255 = scalar_lea.vmem [#allocation2], 24
        %v256 = vld [vmem:[%s255] sm:$0xff]
        %v257 = vld [vmem:[%s255 + $0x8] sm:$0xff]
        %258 = vst [vmem:[#allocation4 + $0x30] sm:$0xff] %v256
        %259 = vst [vmem:[#allocation4 + $0x48] sm:$0xff] %v257
        %v260 = vld [vmem:[%s255 + $0x1] sm:$0xff]
        %v261 = vld [vmem:[%s255 + $0x9] sm:$0xff]
        %262 = vst [vmem:[#allocation4 + $0x38] sm:$0xff] %v260
        %263 = vst [vmem:[#allocation4 + $0x50] sm:$0xff] %v261
        %v264 = vld [vmem:[%s255 + $0x2] sm:$0xff]
        %v265 = vld [vmem:[%s255 + $0xa] sm:$0xff]
        %266 = vst [vmem:[#allocation4 + $0x40] sm:$0xff] %v264
        %267 = vst [vmem:[#allocation4 + $0x58] sm:$0xff] %v265
        %v268 = vld [vmem:[#allocation4] sm:$0xff]
        %v269 = vld [vmem:[#allocation4 + $0x8] sm:$0xff]
        %v270 = vld [vmem:[#allocation4 + $0x10] sm:$0xff]
        %v271 = vld [vmem:[#allocation4 + $0x18] sm:$0xff]
        %v272 = vld [vmem:[#allocation4 + $0x20] sm:$0xff]
        %v273 = vld [vmem:[#allocation4 + $0x28] sm:$0xff]
        %v274 = vld [vmem:[#allocation4 + $0x30] sm:$0xff]
        %v275 = vld [vmem:[#allocation4 + $0x38] sm:$0xff]
        %v276 = vld [vmem:[#allocation4 + $0x40] sm:$0xff]
        %v277 = vld [vmem:[#allocation4 + $0x48] sm:$0xff]
        %v278 = vld [vmem:[#allocation4 + $0x50] sm:$0xff]
        %v279 = vld [vmem:[#allocation4 + $0x58] sm:$0xff]
        %v280 = vld [vmem:[#allocation8] sm:$0xff]
        %v281 = vld [vmem:[#allocation8 + $0x8] sm:$0xff]
        %v282 = vld [vmem:[#allocation8 + $0x10] sm:$0xff]
        %v283 = vld [vmem:[#allocation8 + $0x18] sm:$0xff]
        %v284 = vld [vmem:[#allocation8 + $0x20] sm:$0xff]
        %v285 = vld [vmem:[#allocation8 + $0x28] sm:$0xff]
        %v286 = vld [vmem:[#allocation8 + $0x30] sm:$0xff]
        %v287 = vld [vmem:[#allocation8 + $0x38] sm:$0xff]
        %v288 = vld [vmem:[#allocation8 + $0x40] sm:$0xff]
        %v289 = vld [vmem:[#allocation8 + $0x48] sm:$0xff]
        %v290 = vld [vmem:[#allocation8 + $0x50] sm:$0xff]
        %v291 = vld [vmem:[#allocation8 + $0x58] sm:$0xff]
        %v292 = vld [vmem:[#allocation8 + $0x60] sm:$0xff]
        %v293 = vld [vmem:[#allocation8 + $0x68] sm:$0xff]
        %v294 = vld [vmem:[#allocation8 + $0x70] sm:$0xff]
        %v295 = vld [vmem:[#allocation8 + $0x78] sm:$0xff]
        %v296 = vld [vmem:[#allocation8 + $0x80] sm:$0xff]
        %v297 = vld [vmem:[#allocation8 + $0x88] sm:$0xff]
        %v298 = vld [vmem:[#allocation8 + $0x90] sm:$0xff]
        %v299 = vld [vmem:[#allocation8 + $0x98] sm:$0xff]
        %v300 = vld [vmem:[#allocation8 + $0xa0] sm:$0xff]
        %v301 = vld [vmem:[#allocation8 + $0xa8] sm:$0xff]
        %v302 = vld [vmem:[#allocation8 + $0xb0] sm:$0xff]
        %v303 = vld [vmem:[#allocation8 + $0xb8] sm:$0xff]
        %v304 = vld [vmem:[#allocation8 + $0xc0] sm:$0xff]
        %v305 = vld [vmem:[#allocation8 + $0xc8] sm:$0xff]
        %v306 = vld [vmem:[#allocation8 + $0xd0] sm:$0xff]
        %v307 = vld [vmem:[#allocation8 + $0xd8] sm:$0xff]
        %v308 = vld [vmem:[#allocation8 + $0xe0] sm:$0xff]
        %v309 = vld [vmem:[#allocation8 + $0xe8] sm:$0xff]
        %v310 = vld [vmem:[#allocation8 + $0xf0] sm:$0xff]
        %v311 = vld [vmem:[#allocation8 + $0xf8] sm:$0xff]
        %v312 = vld [vmem:[#allocation8 + $0x100] sm:$0xff]
        %v313 = vld [vmem:[#allocation8 + $0x108] sm:$0xff]
        %v314 = vld [vmem:[#allocation8 + $0x110] sm:$0xff]
        %v315 = vld [vmem:[#allocation8 + $0x118] sm:$0xff]
        %v316 = vld [vmem:[#allocation8 + $0x120] sm:$0xff]
        %v317 = vld [vmem:[#allocation8 + $0x128] sm:$0xff]
        %v318 = vld [vmem:[#allocation8 + $0x130] sm:$0xff]
        %v319 = vld [vmem:[#allocation8 + $0x138] sm:$0xff]
        %v320 = vld [vmem:[#allocation8 + $0x140] sm:$0xff]
        %v321 = vld [vmem:[#allocation8 + $0x148] sm:$0xff]
        %v322 = vld [vmem:[#allocation8 + $0x150] sm:$0xff]
        %v323 = vld [vmem:[#allocation8 + $0x158] sm:$0xff]
        %v324 = vld [vmem:[#allocation8 + $0x160] sm:$0xff]
        %v325 = vld [vmem:[#allocation8 + $0x168] sm:$0xff]
        %v326 = vld [vmem:[#allocation8 + $0x170] sm:$0xff]
        %v327 = vld [vmem:[#allocation8 + $0x178] sm:$0xff]
        %v328 = vld [vmem:[#allocation10] sm:$0x1]
        %v330 = vperm.slane %v328, 0
        %332 = vmatpush.msra.mxu0 %v295
        %333 = vmatpush.msra.mxu0 %v294
        %334 = vmatpush.msra.mxu0 %v293
        %335 = vmatpush.msra.mxu0 %v292
        %336 = vmatpush.msra.mxu0 %v291
        %337 = vmatpush.msra.mxu0 %v290
        %338 = vmatpush.msra.mxu0 %v289
        %339 = vmatpush.msra.mxu0 %v288
        %340 = vmatpush.msra.mxu0 %v287
        %341 = vmatpush.msra.mxu0 %v286
        %342 = vmatpush.msra.mxu0 %v285
        %343 = vmatpush.msra.mxu0 %v284
        %344 = vmatpush.msra.mxu0 %v283
        %345 = vmatpush.msra.mxu0 %v282
        %346 = vmatpush.msra.mxu0 %v281
        %347 = vmatpush.msra.mxu0 %v280
        %348 = vmatmul.f32.gmra.mxu0 %v268
        %v349 = vpop.f32.mrf.mxu0
        %v350 = vadd.f32 %v330, %v349
        %351 = vmatmul.f32.gmra.mxu0 %v271
        %v352 = vpop.f32.mrf.mxu0
        %v353 = vadd.f32 %v330, %v352
        %354 = vmatmul.f32.gmra.mxu0 %v274
        %v355 = vpop.f32.mrf.mxu0
        %v356 = vadd.f32 %v330, %v355
        %357 = vmatmul.f32.gmra.mxu0 %v277
        %v358 = vpop.f32.mrf.mxu0
        %v359 = vadd.f32 %v330, %v358
        %360 = vdwg.mxu0
        %361 = vmatpush.msra.mxu0 %v311
        %362 = vmatpush.msra.mxu0 %v310
        %363 = vmatpush.msra.mxu0 %v309
        %364 = vmatpush.msra.mxu0 %v308
        %365 = vmatpush.msra.mxu0 %v307
        %366 = vmatpush.msra.mxu0 %v306
        %367 = vmatpush.msra.mxu0 %v305
        %368 = vmatpush.msra.mxu0 %v304
        %369 = vmatpush.msra.mxu0 %v303
        %370 = vmatpush.msra.mxu0 %v302
        %371 = vmatpush.msra.mxu0 %v301
        %372 = vmatpush.msra.mxu0 %v300
        %373 = vmatpush.msra.mxu0 %v299
        %374 = vmatpush.msra.mxu0 %v298
        %375 = vmatpush.msra.mxu0 %v297
        %376 = vmatpush.msra.mxu0 %v296
        %377 = vmatmul.f32.gmra.mxu0 %v269
        %v378 = vpop.f32.mrf.mxu0
        %v379 = vadd.f32 %v350, %v378
        %380 = vmatmul.f32.gmra.mxu0 %v272
        %v381 = vpop.f32.mrf.mxu0
        %v382 = vadd.f32 %v353, %v381
        %383 = vmatmul.f32.gmra.mxu0 %v275
        %v384 = vpop.f32.mrf.mxu0
        %v385 = vadd.f32 %v356, %v384
        %386 = vmatmul.f32.gmra.mxu0 %v278
        %v387 = vpop.f32.mrf.mxu0
        %v388 = vadd.f32 %v359, %v387
        %389 = vdwg.mxu0
        %390 = vmatpush.msra.mxu0 %v327
        %391 = vmatpush.msra.mxu0 %v326
        %392 = vmatpush.msra.mxu0 %v325
        %393 = vmatpush.msra.mxu0 %v324
        %394 = vmatpush.msra.mxu0 %v323
        %395 = vmatpush.msra.mxu0 %v322
        %396 = vmatpush.msra.mxu0 %v321
        %397 = vmatpush.msra.mxu0 %v320
        %398 = vmatpush.msra.mxu0 %v319
        %399 = vmatpush.msra.mxu0 %v318
        %400 = vmatpush.msra.mxu0 %v317
        %401 = vmatpush.msra.mxu0 %v316
        %402 = vmatpush.msra.mxu0 %v315
        %403 = vmatpush.msra.mxu0 %v314
        %404 = vmatpush.msra.mxu0 %v313
        %405 = vmatpush.msra.mxu0 %v312
        %406 = vmatmul.f32.gmra.mxu0 %v270
        %v407 = vpop.f32.mrf.mxu0
        %v408 = vadd.f32 %v379, %v407
        %409 = vmatmul.f32.gmra.mxu0 %v273
        %v410 = vpop.f32.mrf.mxu0
        %v411 = vadd.f32 %v382, %v410
        %412 = vmatmul.f32.gmra.mxu0 %v276
        %v413 = vpop.f32.mrf.mxu0
        %v414 = vadd.f32 %v385, %v413
        %415 = vmatmul.f32.gmra.mxu0 %v279
        %v416 = vpop.f32.mrf.mxu0
        %v417 = vadd.f32 %v388, %v416
        %418 = vdwg.mxu0
        %v419 = vmax.f32 %v408, 0.0
        %v420 = vmax.f32 %v411, 0.0
        %v421 = vmax.f32 %v414, 0.0
        %v422 = vmax.f32 %v417, 0.0
        %423 = vst [vmem:[#allocation3 + $0x1] sm:$0xff] %v419
        %424 = vst [vmem:[#allocation3 + $0x9] sm:$0xff] %v420
        %s425 = scalar_lea.vmem [#allocation3], 24
        %426 = vst [vmem:[%s425 + $0x1] sm:$0xff] %v421
        %427 = vst [vmem:[%s425 + $0x9] sm:$0xff] %v422
        %v428 = vld [vmem:[#allocation3] sm:$0xff]
        %v429 = vld [vmem:[#allocation3 + $0x8] sm:$0xff]
        %430 = vst [vmem:[#allocation4] sm:$0xff] %v428
        %431 = vst [vmem:[#allocation4 + $0x18] sm:$0xff] %v429
        %v432 = vld [vmem:[#allocation3 + $0x1] sm:$0xff]
        %v433 = vld [vmem:[#allocation3 + $0x9] sm:$0xff]
        %434 = vst [vmem:[#allocation4 + $0x8] sm:$0xff] %v432
        %435 = vst [vmem:[#allocation4 + $0x20] sm:$0xff] %v433
        %v436 = vld [vmem:[#allocation3 + $0x2] sm:$0xff]
        %v437 = vld [vmem:[#allocation3 + $0xa] sm:$0xff]
        %438 = vst [vmem:[#allocation4 + $0x10] sm:$0xff] %v436
        %439 = vst [vmem:[#allocation4 + $0x28] sm:$0xff] %v437
        %v440 = vld [vmem:[%s425] sm:$0xff]
        %v441 = vld [vmem:[%s425 + $0x8] sm:$0xff]
        %442 = vst [vmem:[#allocation4 + $0x30] sm:$0xff] %v440
        %443 = vst [vmem:[#allocation4 + $0x48] sm:$0xff] %v441
        %v444 = vld [vmem:[%s425 + $0x1] sm:$0xff]
        %v445 = vld [vmem:[%s425 + $0x9] sm:$0xff]
        %446 = vst [vmem:[#allocation4 + $0x38] sm:$0xff] %v444
        %447 = vst [vmem:[#allocation4 + $0x50] sm:$0xff] %v445
        %v448 = vld [vmem:[%s425 + $0x2] sm:$0xff]
        %v449 = vld [vmem:[%s425 + $0xa] sm:$0xff]
        %450 = vst [vmem:[#allocation4 + $0x40] sm:$0xff] %v448
        %451 = vst [vmem:[#allocation4 + $0x58] sm:$0xff] %v449
        %v452 = vld [vmem:[#allocation4] sm:$0xff]
        %v453 = vld [vmem:[#allocation4 + $0x8] sm:$0xff]
        %v454 = vld [vmem:[#allocation4 + $0x10] sm:$0xff]
        %v455 = vld [vmem:[#allocation4 + $0x18] sm:$0xff]
        %v456 = vld [vmem:[#allocation4 + $0x20] sm:$0xff]
        %v457 = vld [vmem:[#allocation4 + $0x28] sm:$0xff]
        %v458 = vld [vmem:[#allocation4 + $0x30] sm:$0xff]
        %v459 = vld [vmem:[#allocation4 + $0x38] sm:$0xff]
        %v460 = vld [vmem:[#allocation4 + $0x40] sm:$0xff]
        %v461 = vld [vmem:[#allocation4 + $0x48] sm:$0xff]
        %v462 = vld [vmem:[#allocation4 + $0x50] sm:$0xff]
        %v463 = vld [vmem:[#allocation4 + $0x58] sm:$0xff]
        %s464 = scalar_lea.vmem [#allocation8], 384
        %v465 = vld [vmem:[%s464] sm:$0xff]
        %v466 = vld [vmem:[%s464 + $0x8] sm:$0xff]
        %v467 = vld [vmem:[%s464 + $0x10] sm:$0xff]
        %v468 = vld [vmem:[%s464 + $0x18] sm:$0xff]
        %v469 = vld [vmem:[%s464 + $0x20] sm:$0xff]
        %v470 = vld [vmem:[%s464 + $0x28] sm:$0xff]
        %v471 = vld [vmem:[%s464 + $0x30] sm:$0xff]
        %v472 = vld [vmem:[%s464 + $0x38] sm:$0xff]
        %v473 = vld [vmem:[%s464 + $0x40] sm:$0xff]
        %v474 = vld [vmem:[%s464 + $0x48] sm:$0xff]
        %v475 = vld [vmem:[%s464 + $0x50] sm:$0xff]
        %v476 = vld [vmem:[%s464 + $0x58] sm:$0xff]
        %v477 = vld [vmem:[%s464 + $0x60] sm:$0xff]
        %v478 = vld [vmem:[%s464 + $0x68] sm:$0xff]
        %v479 = vld [vmem:[%s464 + $0x70] sm:$0xff]
        %v480 = vld [vmem:[%s464 + $0x78] sm:$0xff]
        %v481 = vld [vmem:[%s464 + $0x80] sm:$0xff]
        %v482 = vld [vmem:[%s464 + $0x88] sm:$0xff]
        %v483 = vld [vmem:[%s464 + $0x90] sm:$0xff]
        %v484 = vld [vmem:[%s464 + $0x98] sm:$0xff]
        %v485 = vld [vmem:[%s464 + $0xa0] sm:$0xff]
        %v486 = vld [vmem:[%s464 + $0xa8] sm:$0xff]
        %v487 = vld [vmem:[%s464 + $0xb0] sm:$0xff]
        %v488 = vld [vmem:[%s464 + $0xb8] sm:$0xff]
        %v489 = vld [vmem:[%s464 + $0xc0] sm:$0xff]
        %v490 = vld [vmem:[%s464 + $0xc8] sm:$0xff]
        %v491 = vld [vmem:[%s464 + $0xd0] sm:$0xff]
        %v492 = vld [vmem:[%s464 + $0xd8] sm:$0xff]
        %v493 = vld [vmem:[%s464 + $0xe0] sm:$0xff]
        %v494 = vld [vmem:[%s464 + $0xe8] sm:$0xff]
        %v495 = vld [vmem:[%s464 + $0xf0] sm:$0xff]
        %v496 = vld [vmem:[%s464 + $0xf8] sm:$0xff]
        %v497 = vld [vmem:[%s464 + $0x100] sm:$0xff]
        %v498 = vld [vmem:[%s464 + $0x108] sm:$0xff]
        %v499 = vld [vmem:[%s464 + $0x110] sm:$0xff]
        %v500 = vld [vmem:[%s464 + $0x118] sm:$0xff]
        %v501 = vld [vmem:[%s464 + $0x120] sm:$0xff]
        %v502 = vld [vmem:[%s464 + $0x128] sm:$0xff]
        %v503 = vld [vmem:[%s464 + $0x130] sm:$0xff]
        %v504 = vld [vmem:[%s464 + $0x138] sm:$0xff]
        %v505 = vld [vmem:[%s464 + $0x140] sm:$0xff]
        %v506 = vld [vmem:[%s464 + $0x148] sm:$0xff]
        %v507 = vld [vmem:[%s464 + $0x150] sm:$0xff]
        %v508 = vld [vmem:[%s464 + $0x158] sm:$0xff]
        %v509 = vld [vmem:[%s464 + $0x160] sm:$0xff]
        %v510 = vld [vmem:[%s464 + $0x168] sm:$0xff]
        %v511 = vld [vmem:[%s464 + $0x170] sm:$0xff]
        %v512 = vld [vmem:[%s464 + $0x178] sm:$0xff]
        %s513 = scalar_lea.vmem [#allocation10], 1
        %v514 = vld [vmem:[%s513] sm:$0x1]
        %v516 = vperm.slane %v514, 0
        %518 = vmatpush.msra.mxu0 %v480
        %519 = vmatpush.msra.mxu0 %v479
        %520 = vmatpush.msra.mxu0 %v478
        %521 = vmatpush.msra.mxu0 %v477
        %522 = vmatpush.msra.mxu0 %v476
        %523 = vmatpush.msra.mxu0 %v475
        %524 = vmatpush.msra.mxu0 %v474
        %525 = vmatpush.msra.mxu0 %v473
        %526 = vmatpush.msra.mxu0 %v472
        %527 = vmatpush.msra.mxu0 %v471
        %528 = vmatpush.msra.mxu0 %v470
        %529 = vmatpush.msra.mxu0 %v469
        %530 = vmatpush.msra.mxu0 %v468
        %531 = vmatpush.msra.mxu0 %v467
        %532 = vmatpush.msra.mxu0 %v466
        %533 = vmatpush.msra.mxu0 %v465
        %534 = vmatmul.f32.gmra.mxu0 %v452
        %v535 = vpop.f32.mrf.mxu0
        %v536 = vadd.f32 %v516, %v535
        %537 = vmatmul.f32.gmra.mxu0 %v455
        %v538 = vpop.f32.mrf.mxu0
        %v539 = vadd.f32 %v516, %v538
        %540 = vmatmul.f32.gmra.mxu0 %v458
        %v541 = vpop.f32.mrf.mxu0
        %v542 = vadd.f32 %v516, %v541
        %543 = vmatmul.f32.gmra.mxu0 %v461
        %v544 = vpop.f32.mrf.mxu0
        %v545 = vadd.f32 %v516, %v544
        %546 = vdwg.mxu0
        %547 = vmatpush.msra.mxu0 %v496
        %548 = vmatpush.msra.mxu0 %v495
        %549 = vmatpush.msra.mxu0 %v494
        %550 = vmatpush.msra.mxu0 %v493
        %551 = vmatpush.msra.mxu0 %v492
        %552 = vmatpush.msra.mxu0 %v491
        %553 = vmatpush.msra.mxu0 %v490
        %554 = vmatpush.msra.mxu0 %v489
        %555 = vmatpush.msra.mxu0 %v488
        %556 = vmatpush.msra.mxu0 %v487
        %557 = vmatpush.msra.mxu0 %v486
        %558 = vmatpush.msra.mxu0 %v485
        %559 = vmatpush.msra.mxu0 %v484
        %560 = vmatpush.msra.mxu0 %v483
        %561 = vmatpush.msra.mxu0 %v482
        %562 = vmatpush.msra.mxu0 %v481
        %563 = vmatmul.f32.gmra.mxu0 %v453
        %v564 = vpop.f32.mrf.mxu0
        %v565 = vadd.f32 %v536, %v564
        %566 = vmatmul.f32.gmra.mxu0 %v456
        %v567 = vpop.f32.mrf.mxu0
        %v568 = vadd.f32 %v539, %v567
        %569 = vmatmul.f32.gmra.mxu0 %v459
        %v570 = vpop.f32.mrf.mxu0
        %v571 = vadd.f32 %v542, %v570
        %572 = vmatmul.f32.gmra.mxu0 %v462
        %v573 = vpop.f32.mrf.mxu0
        %v574 = vadd.f32 %v545, %v573
        %575 = vdwg.mxu0
        %576 = vmatpush.msra.mxu0 %v512
        %577 = vmatpush.msra.mxu0 %v511
        %578 = vmatpush.msra.mxu0 %v510
        %579 = vmatpush.msra.mxu0 %v509
        %580 = vmatpush.msra.mxu0 %v508
        %581 = vmatpush.msra.mxu0 %v507
        %582 = vmatpush.msra.mxu0 %v506
        %583 = vmatpush.msra.mxu0 %v505
        %584 = vmatpush.msra.mxu0 %v504
        %585 = vmatpush.msra.mxu0 %v503
        %586 = vmatpush.msra.mxu0 %v502
        %587 = vmatpush.msra.mxu0 %v501
        %588 = vmatpush.msra.mxu0 %v500
        %589 = vmatpush.msra.mxu0 %v499
        %590 = vmatpush.msra.mxu0 %v498
        %591 = vmatpush.msra.mxu0 %v497
        %592 = vmatmul.f32.gmra.mxu0 %v454
        %v593 = vpop.f32.mrf.mxu0
        %v594 = vadd.f32 %v565, %v593
        %595 = vmatmul.f32.gmra.mxu0 %v457
        %v596 = vpop.f32.mrf.mxu0
        %v597 = vadd.f32 %v568, %v596
        %598 = vmatmul.f32.gmra.mxu0 %v460
        %v599 = vpop.f32.mrf.mxu0
        %v600 = vadd.f32 %v571, %v599
        %601 = vmatmul.f32.gmra.mxu0 %v463
        %v602 = vpop.f32.mrf.mxu0
        %v603 = vadd.f32 %v574, %v602
        %604 = vdwg.mxu0
        %v605 = vmax.f32 %v594, 0.0
        %v606 = vmax.f32 %v597, 0.0
        %v607 = vmax.f32 %v600, 0.0
        %v608 = vmax.f32 %v603, 0.0
        %609 = vst [vmem:[#allocation2 + $0x1] sm:$0xff] %v605
        %610 = vst [vmem:[#allocation2 + $0x9] sm:$0xff] %v606
        %611 = vst [vmem:[%s255 + $0x1] sm:$0xff] %v607
        %612 = vst [vmem:[%s255 + $0x9] sm:$0xff] %v608
        %v613 = vld [vmem:[#allocation2] sm:$0xff]
        %v614 = vld [vmem:[#allocation2 + $0x8] sm:$0xff]
        %615 = vst [vmem:[#allocation4] sm:$0xff] %v613
        %616 = vst [vmem:[#allocation4 + $0x18] sm:$0xff] %v614
        %v617 = vld [vmem:[#allocation2 + $0x1] sm:$0xff]
        %v618 = vld [vmem:[#allocation2 + $0x9] sm:$0xff]
        %619 = vst [vmem:[#allocation4 + $0x8] sm:$0xff] %v617
        %620 = vst [vmem:[#allocation4 + $0x20] sm:$0xff] %v618
        %v621 = vld [vmem:[#allocation2 + $0x2] sm:$0xff]
        %v622 = vld [vmem:[#allocation2 + $0xa] sm:$0xff]
        %623 = vst [vmem:[#allocation4 + $0x10] sm:$0xff] %v621
        %624 = vst [vmem:[#allocation4 + $0x28] sm:$0xff] %v622
        %v625 = vld [vmem:[%s255] sm:$0xff]
        %v626 = vld [vmem:[%s255 + $0x8] sm:$0xff]
        %627 = vst [vmem:[#allocation4 + $0x30] sm:$0xff] %v625
        %628 = vst [vmem:[#allocation4 + $0x48] sm:$0xff] %v626
        %v629 = vld [vmem:[%s255 + $0x1] sm:$0xff]
        %v630 = vld [vmem:[%s255 + $0x9] sm:$0xff]
        %631 = vst [vmem:[#allocation4 + $0x38] sm:$0xff] %v629
        %632 = vst [vmem:[#allocation4 + $0x50] sm:$0xff] %v630
        %v633 = vld [vmem:[%s255 + $0x2] sm:$0xff]
        %v634 = vld [vmem:[%s255 + $0xa] sm:$0xff]
        %635 = vst [vmem:[#allocation4 + $0x40] sm:$0xff] %v633
        %636 = vst [vmem:[#allocation4 + $0x58] sm:$0xff] %v634
        %v637 = vld [vmem:[#allocation4] sm:$0xff]
        %v638 = vld [vmem:[#allocation4 + $0x8] sm:$0xff]
        %v639 = vld [vmem:[#allocation4 + $0x10] sm:$0xff]
        %v640 = vld [vmem:[#allocation4 + $0x18] sm:$0xff]
        %v641 = vld [vmem:[#allocation4 + $0x20] sm:$0xff]
        %v642 = vld [vmem:[#allocation4 + $0x28] sm:$0xff]
        %v643 = vld [vmem:[#allocation4 + $0x30] sm:$0xff]
        %v644 = vld [vmem:[#allocation4 + $0x38] sm:$0xff]
        %v645 = vld [vmem:[#allocation4 + $0x40] sm:$0xff]
        %v646 = vld [vmem:[#allocation4 + $0x48] sm:$0xff]
        %v647 = vld [vmem:[#allocation4 + $0x50] sm:$0xff]
        %v648 = vld [vmem:[#allocation4 + $0x58] sm:$0xff]
        %s649 = scalar_lea.vmem [#allocation8], 768
        %v650 = vld [vmem:[%s649] sm:$0xff]
        %v651 = vld [vmem:[%s649 + $0x8] sm:$0xff]
        %v652 = vld [vmem:[%s649 + $0x10] sm:$0xff]
        %v653 = vld [vmem:[%s649 + $0x18] sm:$0xff]
        %v654 = vld [vmem:[%s649 + $0x20] sm:$0xff]
        %v655 = vld [vmem:[%s649 + $0x28] sm:$0xff]
        %v656 = vld [vmem:[%s649 + $0x30] sm:$0xff]
        %v657 = vld [vmem:[%s649 + $0x38] sm:$0xff]
        %v658 = vld [vmem:[%s649 + $0x40] sm:$0xff]
        %v659 = vld [vmem:[%s649 + $0x48] sm:$0xff]
        %v660 = vld [vmem:[%s649 + $0x50] sm:$0xff]
        %v661 = vld [vmem:[%s649 + $0x58] sm:$0xff]
        %v662 = vld [vmem:[%s649 + $0x60] sm:$0xff]
        %v663 = vld [vmem:[%s649 + $0x68] sm:$0xff]
        %v664 = vld [vmem:[%s649 + $0x70] sm:$0xff]
        %v665 = vld [vmem:[%s649 + $0x78] sm:$0xff]
        %v666 = vld [vmem:[%s649 + $0x80] sm:$0xff]
        %v667 = vld [vmem:[%s649 + $0x88] sm:$0xff]
        %v668 = vld [vmem:[%s649 + $0x90] sm:$0xff]
        %v669 = vld [vmem:[%s649 + $0x98] sm:$0xff]
        %v670 = vld [vmem:[%s649 + $0xa0] sm:$0xff]
        %v671 = vld [vmem:[%s649 + $0xa8] sm:$0xff]
        %v672 = vld [vmem:[%s649 + $0xb0] sm:$0xff]
        %v673 = vld [vmem:[%s649 + $0xb8] sm:$0xff]
        %v674 = vld [vmem:[%s649 + $0xc0] sm:$0xff]
        %v675 = vld [vmem:[%s649 + $0xc8] sm:$0xff]
        %v676 = vld [vmem:[%s649 + $0xd0] sm:$0xff]
        %v677 = vld [vmem:[%s649 + $0xd8] sm:$0xff]
        %v678 = vld [vmem:[%s649 + $0xe0] sm:$0xff]
        %v679 = vld [vmem:[%s649 + $0xe8] sm:$0xff]
        %v680 = vld [vmem:[%s649 + $0xf0] sm:$0xff]
        %v681 = vld [vmem:[%s649 + $0xf8] sm:$0xff]
        %v682 = vld [vmem:[%s649 + $0x100] sm:$0xff]
        %v683 = vld [vmem:[%s649 + $0x108] sm:$0xff]
        %v684 = vld [vmem:[%s649 + $0x110] sm:$0xff]
        %v685 = vld [vmem:[%s649 + $0x118] sm:$0xff]
        %v686 = vld [vmem:[%s649 + $0x120] sm:$0xff]
        %v687 = vld [vmem:[%s649 + $0x128] sm:$0xff]
        %v688 = vld [vmem:[%s649 + $0x130] sm:$0xff]
        %v689 = vld [vmem:[%s649 + $0x138] sm:$0xff]
        %v690 = vld [vmem:[%s649 + $0x140] sm:$0xff]
        %v691 = vld [vmem:[%s649 + $0x148] sm:$0xff]
        %v692 = vld [vmem:[%s649 + $0x150] sm:$0xff]
        %v693 = vld [vmem:[%s649 + $0x158] sm:$0xff]
        %v694 = vld [vmem:[%s649 + $0x160] sm:$0xff]
        %v695 = vld [vmem:[%s649 + $0x168] sm:$0xff]
        %v696 = vld [vmem:[%s649 + $0x170] sm:$0xff]
        %v697 = vld [vmem:[%s649 + $0x178] sm:$0xff]
        %s698 = scalar_lea.vmem [#allocation10], 2
        %v699 = vld [vmem:[%s698] sm:$0x1]
        %v701 = vperm.slane %v699, 0
        %703 = vmatpush.msra.mxu0 %v665
        %704 = vmatpush.msra.mxu0 %v664
        %705 = vmatpush.msra.mxu0 %v663
        %706 = vmatpush.msra.mxu0 %v662
        %707 = vmatpush.msra.mxu0 %v661
        %708 = vmatpush.msra.mxu0 %v660
        %709 = vmatpush.msra.mxu0 %v659
        %710 = vmatpush.msra.mxu0 %v658
        %711 = vmatpush.msra.mxu0 %v657
        %712 = vmatpush.msra.mxu0 %v656
        %713 = vmatpush.msra.mxu0 %v655
        %714 = vmatpush.msra.mxu0 %v654
        %715 = vmatpush.msra.mxu0 %v653
        %716 = vmatpush.msra.mxu0 %v652
        %717 = vmatpush.msra.mxu0 %v651
        %718 = vmatpush.msra.mxu0 %v650
        %719 = vmatmul.f32.gmra.mxu0 %v637
        %v720 = vpop.f32.mrf.mxu0
        %v721 = vadd.f32 %v701, %v720
        %722 = vmatmul.f32.gmra.mxu0 %v640
        %v723 = vpop.f32.mrf.mxu0
        %v724 = vadd.f32 %v701, %v723
        %725 = vmatmul.f32.gmra.mxu0 %v643
        %v726 = vpop.f32.mrf.mxu0
        %v727 = vadd.f32 %v701, %v726
        %728 = vmatmul.f32.gmra.mxu0 %v646
        %v729 = vpop.f32.mrf.mxu0
        %v730 = vadd.f32 %v701, %v729
        %731 = vdwg.mxu0
        %732 = vmatpush.msra.mxu0 %v681
        %733 = vmatpush.msra.mxu0 %v680
        %734 = vmatpush.msra.mxu0 %v679
        %735 = vmatpush.msra.mxu0 %v678
        %736 = vmatpush.msra.mxu0 %v677
        %737 = vmatpush.msra.mxu0 %v676
        %738 = vmatpush.msra.mxu0 %v675
        %739 = vmatpush.msra.mxu0 %v674
        %740 = vmatpush.msra.mxu0 %v673
        %741 = vmatpush.msra.mxu0 %v672
        %742 = vmatpush.msra.mxu0 %v671
        %743 = vmatpush.msra.mxu0 %v670
        %744 = vmatpush.msra.mxu0 %v669
        %745 = vmatpush.msra.mxu0 %v668
        %746 = vmatpush.msra.mxu0 %v667
        %747 = vmatpush.msra.mxu0 %v666
        %748 = vmatmul.f32.gmra.mxu0 %v638
        %v749 = vpop.f32.mrf.mxu0
        %v750 = vadd.f32 %v721, %v749
        %751 = vmatmul.f32.gmra.mxu0 %v641
        %v752 = vpop.f32.mrf.mxu0
        %v753 = vadd.f32 %v724, %v752
        %754 = vmatmul.f32.gmra.mxu0 %v644
        %v755 = vpop.f32.mrf.mxu0
        %v756 = vadd.f32 %v727, %v755
        %757 = vmatmul.f32.gmra.mxu0 %v647
        %v758 = vpop.f32.mrf.mxu0
        %v759 = vadd.f32 %v730, %v758
        %760 = vdwg.mxu0
        %761 = vmatpush.msra.mxu0 %v697
        %762 = vmatpush.msra.mxu0 %v696
        %763 = vmatpush.msra.mxu0 %v695
        %764 = vmatpush.msra.mxu0 %v694
        %765 = vmatpush.msra.mxu0 %v693
        %766 = vmatpush.msra.mxu0 %v692
        %767 = vmatpush.msra.mxu0 %v691
        %768 = vmatpush.msra.mxu0 %v690
        %769 = vmatpush.msra.mxu0 %v689
        %770 = vmatpush.msra.mxu0 %v688
        %771 = vmatpush.msra.mxu0 %v687
        %772 = vmatpush.msra.mxu0 %v686
        %773 = vmatpush.msra.mxu0 %v685
        %774 = vmatpush.msra.mxu0 %v684
        %775 = vmatpush.msra.mxu0 %v683
        %776 = vmatpush.msra.mxu0 %v682
        %777 = vmatmul.f32.gmra.mxu0 %v639
        %v778 = vpop.f32.mrf.mxu0
        %v779 = vadd.f32 %v750, %v778
        %780 = vmatmul.f32.gmra.mxu0 %v642
        %v781 = vpop.f32.mrf.mxu0
        %v782 = vadd.f32 %v753, %v781
        %783 = vmatmul.f32.gmra.mxu0 %v645
        %v784 = vpop.f32.mrf.mxu0
        %v785 = vadd.f32 %v756, %v784
        %786 = vmatmul.f32.gmra.mxu0 %v648
        %v787 = vpop.f32.mrf.mxu0
        %v788 = vadd.f32 %v759, %v787
        %789 = vdwg.mxu0
        %790 = vst [vmem:[%s224] sm:$0xff] %v779
        %791 = vst [vmem:[%s224 + $0x8] sm:$0xff] %v782
        %s792 = scalar_lea.vmem %s224, 16 [#allocation11]
        %793 = vst [vmem:[%s792] sm:$0xff] %v785
        %794 = vst [vmem:[%s792 + $0x8] sm:$0xff] %v788
        %s795 = sand.u32 %s97, 1
        %s796 = scalar_lea.sflag [#allocation7], %s795
        %s797 = sand.u32 %s97, 1
        %s798 = smul.addr %s797, 32
        %s799 = scalar_lea.vmem [#allocation11], %s798
        // Predicated region
        $region45: #{tpu_custom_call.1} parent=31 // pred_check
          %p800 = pneg %p107
        $region46: #{tpu_custom_call.1} parent=31 // pred_check_branch
          %802 = sbr.rel (%p800) target = $region48
        $region47: #{tpu_custom_call.1} parent=31 // pred_region
          %s803 = smul.u32 2, %s21
          %805 = vsyncadd %s796, 0
          %s806 = smul.addr %s803, 2
          %s807 = smul.addr %s806, 8
          %s808 = scalar_lea.hbm %s3, %s807
          %s809 = sshll.u32 %s799, 4
          %s810 = int_to_ptr.vmem [resolvable:$true] %s809
          %s811 = sshll.u32 %s808, 4
          %s812 = int_to_ptr.hbm [resolvable:$true] %s811
          %817 = dma.vmem_to_hbm [thread:$0]  %s810, 512, %s812, %s796, 128, 128, 8
        $region48: #{tpu_custom_call.1} parent=31 // pred_fallthru
          _
      $region32: #{tpu_custom_call.1} parent=5 // pred_fallthru
        _
      %p818 = scmp.le.s32.totalorder 2, %s16
      // Predicated region
      $region49: #{tpu_custom_call.1} parent=5 // pred_check
        %p819 = pneg %p818
      $region50: #{tpu_custom_call.1} parent=5 // pred_check_branch
        %821 = sbr.rel (%p819) target = $region52
      $region51: #{tpu_custom_call.1} parent=5 // pred_region
        %s822 = ssub.s32 %s16, 2
        // Predicated region
        $region53: #{tpu_custom_call.1} parent=51 // pred_check
          %p823 = pneg %p113
        $region54: #{tpu_custom_call.1} parent=51 // pred_check_branch
          %825 = sbr.rel (%p823) target = $region56
        $region55: #{tpu_custom_call.1} parent=51 // pred_region
          %s826 = sand.u32 %s98, 1
          %s827 = scalar_lea.sflag [#allocation7], %s826
          %s828 = sand.u32 %s98, 1
          %s829 = smul.addr %s828, 32
          %s830 = scalar_lea.vmem [#allocation11], %s829
          %832 = dma.done %s827, 512
        $region56: #{tpu_custom_call.1} parent=51 // pred_fallthru
          _
      $region52: #{tpu_custom_call.1} parent=5 // pred_fallthru
        _
    $region6: #{tpu_custom_call.1} parent=1 // loop_footer
      %s20 = sadd.s32 1, %s16
    $region7: #{tpu_custom_call.1} parent=1 // loop_footer_branch
      %15 = sbr.rel target = $region3
    $region8: #{tpu_custom_call.1} parent=1 // loop_exit
      _
    %833 = vsyncpa [#allocation6], 1
    %s834 = scalar_lea.sflag [#allocation6], 1
    %835 = vsyncpa %s834, 1
    %836 = vsyncpa [#allocation9], 1
    %837 = vsyncpa [#allocation7], 1
    %s838 = scalar_lea.sflag [#allocation7], 1
    %839 = vsyncpa %s838, 1

// kernel: tpu_custom_call.1
$region0: #{tpu_custom_call.1}
  #allocation0 [shape = 'u32[]', space=smem, size = 0x4, offset = 0x4, fixed_abs, tag = 'smem constant byte address 0x4 - core index']
  #allocation1 [shape = 'u32[72,128]{1,0:T(1,128)}', space=vmem, size = 0x9000, scoped, tag = 'internal scratch']
  #allocation2 [shape = 'f32[2,18,128]{2,1,0:T(8,128)}', space=vmem, size = 0x6000, scoped, tag = 'scratch operand']
  #allocation3 [shape = 'f32[2,18,128]{2,1,0:T(8,128)}', space=vmem, size = 0x6000, scoped, tag = 'scratch operand']
  #allocation4 [shape = 'f32[32,384]{1,0:T(8,128)}', space=vmem, size = 0xc000, scoped, tag = 'scratch operand']
  %s0 = inlined_call_operand.hbm [shape: f32[4,16,128], index: 0, kind: input, shape index: {}]
  %s1 = inlined_call_operand.hbm [shape: f32[3,384,128], index: 1, kind: input, shape index: {}]
  %s2 = inlined_call_operand.hbm [shape: f32[3,1,128], index: 2, kind: input, shape index: {}]
  %s3 = inlined_call_operand.hbm [shape: f32[4,16,128], index: 3, kind: output, shape index: {}]
  %s4 = sld [smem:[#allocation0]]
  $region57: #{tpu_custom_call.1} parent=0
    _
  %s6 = ssub.s32 1, %s4
  %s7 = scalar_select 0, %s6, %s4
  $region1: #{tpu_custom_call.1} parent=0
    #allocation5 [shape = 'u8[32768]{0}', space=vmem, size = 0x8000, scoped, tag = 'input window, operand 0']
    #allocation6 [shape = 's32[2]{0}', space=sflag, size = 0x8, scoped, tag = 'scoped memory for tpu_custom_call.1']
    #allocation7 [shape = 's32[2]{0}', space=sflag, size = 0x8, scoped, tag = 'scoped memory for tpu_custom_call.1']
    #allocation8 [shape = 'u8[589824]{0}', space=vmem, size = 0x90000, scoped, tag = 'input window, operand 1, single buffered']
    #allocation9 [shape = 's32[1]{0}', space=sflag, size = 0x4, scoped, tag = 'scoped memory for tpu_custom_call.1']
    #allocation10 [shape = 'u8[1536]{0}', space=vmem, size = 0x800, scoped, tag = 'input window, operand 2, single buffered']
    #allocation11 [shape = 'u8[32768]{0}', space=vmem, size = 0x8000, scoped, tag = 'output window, operand 0']
    %8 = vsyncpa [#allocation6], 0
    %s9 = scalar_lea.sflag [#allocation6], 1
    %10 = vsyncpa %s9, 0
    %11 = vsyncpa [#allocation9], 0
    %12 = vsyncpa [#allocation7], 0
    %s13 = scalar_lea.sflag [#allocation7], 1
    %14 = vsyncpa %s13, 0
    loop: start=0, step=1, limit=4
    $region2: #{tpu_custom_call.1} parent=1 // loop_pre_header
      _
    $region3: #{tpu_custom_call.1} parent=1 // loop_header
      %s16 = sphi 0, %s20
      %p17 = scmp.ge.s32.totalorder %s16, 4
      %s26 = sphi 0, %s28
      %s29 = sphi 0, %s26
      %s30 = sphi 0, %s29
      %s46 = sphi 0, %s30
      %s50 = sphi 0, %s50
      %s52 = sphi 0, %s50
      %s53 = sphi 0, %s52
      %s67 = sphi 0, %s53
      %s71 = sphi 0, %s71
      %s73 = sphi 0, %s71
      %s74 = sphi 0, %s73
      %s88 = sphi 0, %s74
      %s94 = sphi 0, %s96
      %s97 = sphi 0, %s94
      %s98 = sphi 0, %s97
      %s114 = sphi 0, %s98
    $region4: #{tpu_custom_call.1} parent=1 // loop_header_branch
      %19 = sbr.rel (%p17) target = $region8
    $region5: #{tpu_custom_call.1} parent=1 // loop_body
      %s21 = ssub.s32 %s16, 1
      %s22 = ssub.s32 %s16, 2
      %s23 = sadd.s32 %s16, 1
      %s24 = ssub.s32 %s16, %s23
      %p25 = scmp.eq.s32.totalorder %s24, 0
      %s27 = sadd.s32 %s26, 1
      %s28 = scalar_select %p25, %s26, %s27
      %p31 = pneg %p25
      %p32 = scmp.eq.s32.totalorder %s16, 1
      %p33 = por %p31, %p32
      %p34 = scmp.ne.s32.totalorder %s26, %s29
      %p35 = scmp.eq.s32.totalorder %s16, 0
      %p36 = por %p34, %p35
      %p37 = scmp.ne.s32.totalorder %s26, %s29
      %p38 = scmp.eq.s32.totalorder %s21, 1
      %p39 = por %p37, %p38
      %p40 = scmp.ne.s32.totalorder %s29, %s30
      %p41 = scmp.eq.s32.totalorder %s21, 0
      %p42 = por %p40, %p41
      %p43 = scmp.ne.s32.totalorder %s29, %s30
      %p44 = scmp.eq.s32.totalorder %s22, 1
      %p45 = por %p43, %p44
      %p47 = scmp.ne.s32.totalorder %s30, %s46
      %p48 = scmp.eq.s32.totalorder %s22, 0
      %p49 = por %p47, %p48
      %s51 = sadd.s32 %s50, 1
      %p54 = scmp.eq.s32.totalorder %s16, 1
      %p55 = scmp.ne.s32.totalorder %s50, %s52
      %p56 = scmp.eq.s32.totalorder %s16, 0
      %p57 = por %p55, %p56
      %p58 = scmp.ne.s32.totalorder %s50, %s52
      %p59 = scmp.eq.s32.totalorder %s21, 1
      %p60 = por %p58, %p59
      %p61 = scmp.ne.s32.totalorder %s52, %s53
      %p62 = scmp.eq.s32.totalorder %s21, 0
      %p63 = por %p61, %p62
      %p64 = scmp.ne.s32.totalorder %s52, %s53
      %p65 = scmp.eq.s32.totalorder %s22, 1
      %p66 = por %p64, %p65
      %p68 = scmp.ne.s32.totalorder %s53, %s67
      %p69 = scmp.eq.s32.totalorder %s22, 0
      %p70 = por %p68, %p69
      %s72 = sadd.s32 %s71, 1
      %p75 = scmp.eq.s32.totalorder %s16, 1
      %p76 = scmp.ne.s32.totalorder %s71, %s73
      %p77 = scmp.eq.s32.totalorder %s16, 0
      %p78 = por %p76, %p77
      %p79 = scmp.ne.s32.totalorder %s71, %s73
      %p80 = scmp.eq.s32.totalorder %s21, 1
      %p81 = por %p79, %p80
      %p82 = scmp.ne.s32.totalorder %s73, %s74
      %p83 = scmp.eq.s32.totalorder %s21, 0
      %p84 = por %p82, %p83
      %p85 = scmp.ne.s32.totalorder %s73, %s74
      %p86 = scmp.eq.s32.totalorder %s22, 1
      %p87 = por %p85, %p86
      %p89 = scmp.ne.s32.totalorder %s74, %s88
      %p90 = scmp.eq.s32.totalorder %s22, 0
      %p91 = por %p89, %p90
      %s92 = ssub.s32 %s16, %s23
      %p93 = scmp.eq.s32.totalorder %s92, 0
      %s95 = sadd.s32 %s94, 1
      %s96 = scalar_select %p93, %s94, %s95
      %p99 = pneg %p93
      %p100 = scmp.eq.s32.totalorder %s16, 1
      %p101 = por %p99, %p100
      %p102 = scmp.ne.s32.totalorder %s94, %s97
      %p103 = scmp.eq.s32.totalorder %s16, 0
      %p104 = por %p102, %p103
      %p105 = scmp.ne.s32.totalorder %s94, %s97
      %p106 = scmp.eq.s32.totalorder %s21, 1
      %p107 = por %p105, %p106
      %p108 = scmp.ne.s32.totalorder %s97, %s98
      %p109 = scmp.eq.s32.totalorder %s21, 0
      %p110 = por %p108, %p109
      %p111 = scmp.ne.s32.totalorder %s97, %s98
      %p112 = scmp.eq.s32.totalorder %s22, 1
      %p113 = por %p111, %p112
      %p115 = scmp.ne.s32.totalorder %s98, %s114
      %p116 = scmp.eq.s32.totalorder %s22, 0
      %p117 = por %p115, %p116
      %p118 = scmp.le.s32.totalorder 1, %s16
      %p119 = scmp.lt.s32.totalorder %s16, 3
      %p120 = pnand %p118, %p119
      %p121 = pneg %p120
      // Predicated region
      $region9: #{tpu_custom_call.1} parent=5 // pred_check
        _
      $region10: #{tpu_custom_call.1} parent=5 // pred_check_branch
        %123 = sbr.rel (%p120) target = $region12
      $region11: #{tpu_custom_call.1} parent=5 // pred_region
        %s124 = ssub.s32 %s16, 1
        // Predicated region
        $region13: #{tpu_custom_call.1} parent=11 // pred_check
          %p125 = pneg %p63
        $region14: #{tpu_custom_call.1} parent=11 // pred_check_branch
          %127 = sbr.rel (%p125) target = $region16
        $region15: #{tpu_custom_call.1} parent=11 // pred_region
          %129 = vsyncadd [#allocation9], 0
          %s130 = sshll.u32 %s1, 4
          %s131 = int_to_ptr.hbm [resolvable:$true] %s130
          %s132 = sshll.u32 [#allocation8], 4
          %s133 = int_to_ptr.vmem [resolvable:$true] %s132
          %138 = dma.hbm_to_vmem [thread:$0]  %s131, 18432, %s133, [#allocation9], 128, 128, 8
        $region16: #{tpu_custom_call.1} parent=11 // pred_fallthru
          _
        // Predicated region
        $region17: #{tpu_custom_call.1} parent=11 // pred_check
          %p139 = pneg %p84
        $region18: #{tpu_custom_call.1} parent=11 // pred_check_branch
          %141 = sbr.rel (%p139) target = $region20
        $region19: #{tpu_custom_call.1} parent=11 // pred_region
          %143 = vsyncadd [#allocation9], 0
          %s144 = sshll.u32 %s2, 4
          %s145 = int_to_ptr.hbm [resolvable:$true] %s144
          %s146 = sshll.u32 [#allocation10], 4
          %s147 = int_to_ptr.vmem [resolvable:$true] %s146
          %152 = dma.hbm_to_vmem [thread:$0]  %s145, 48, %s147, [#allocation9], 16, 16, 1
        $region20: #{tpu_custom_call.1} parent=11 // pred_fallthru
          _
      $region12: #{tpu_custom_call.1} parent=5 // pred_fallthru
        _
      %p153 = scmp.lt.s32.totalorder %s16, 2
      // Predicated region
      $region21: #{tpu_custom_call.1} parent=5 // pred_check
        %p154 = pneg %p153
      $region22: #{tpu_custom_call.1} parent=5 // pred_check_branch
        %156 = sbr.rel (%p154) target = $region24
      $region23: #{tpu_custom_call.1} parent=5 // pred_region
        // Predicated region
        $region25: #{tpu_custom_call.1} parent=23 // pred_check
          %p157 = pneg %p36
        $region26: #{tpu_custom_call.1} parent=23 // pred_check_branch
          %159 = sbr.rel (%p157) target = $region28
        $region27: #{tpu_custom_call.1} parent=23 // pred_region
          %s160 = sand.u32 %s26, 1
          %s161 = scalar_lea.sflag [#allocation6], %s160
          %s162 = sand.u32 %s26, 1
          %s163 = smul.addr %s162, 32
          %s164 = scalar_lea.vmem [#allocation5], %s163
          %s165 = smul.u32 2, %s16
          %167 = vsyncadd %s161, 0
          %s168 = smul.addr %s165, 2
          %s169 = smul.addr %s168, 8
          %s170 = scalar_lea.hbm %s0, %s169
          %s171 = sshll.u32 %s170, 4
          %s172 = int_to_ptr.hbm [resolvable:$true] %s171
          %s173 = sshll.u32 %s164, 4
          %s174 = int_to_ptr.vmem [resolvable:$true] %s173
          %179 = dma.hbm_to_vmem [thread:$0]  %s172, 512, %s174, %s161, 128, 128, 8
        $region28: #{tpu_custom_call.1} parent=23 // pred_fallthru
          _
      $region24: #{tpu_custom_call.1} parent=5 // pred_fallthru
        _
      %p180 = scmp.le.s32.totalorder 1, %s16
      %p181 = scmp.lt.s32.totalorder %s16, 3
      %p182 = pnand %p180, %p181
      %p183 = pneg %p182
      // Predicated region
      $region29: #{tpu_custom_call.1} parent=5 // pred_check
        _
      $region30: #{tpu_custom_call.1} parent=5 // pred_check_branch
        %185 = sbr.rel (%p182) target = $region32
      $region31: #{tpu_custom_call.1} parent=5 // pred_region
        %s186 = ssub.s32 %s16, 1
        %s187 = sand.u32 %s29, 1
        %s188 = scalar_lea.sflag [#allocation6], %s187
        %s189 = sand.u32 %s29, 1
        %s190 = smul.addr %s189, 32
        %s191 = scalar_lea.vmem [#allocation5], %s190
        // Predicated region
        $region33: #{tpu_custom_call.1} parent=31 // pred_check
          %p192 = pneg %p42
        $region34: #{tpu_custom_call.1} parent=31 // pred_check_branch
          %194 = sbr.rel (%p192) target = $region36
        $region35: #{tpu_custom_call.1} parent=31 // pred_region
          %196 = dma.done %s188, 512
        $region36: #{tpu_custom_call.1} parent=31 // pred_fallthru
          _
        // Predicated region
        $region37: #{tpu_custom_call.1} parent=31 // pred_check
          %p197 = pneg %p63
        $region38: #{tpu_custom_call.1} parent=31 // pred_check_branch
          %199 = sbr.rel (%p197) target = $region40
        $region39: #{tpu_custom_call.1} parent=31 // pred_region
          %201 = dma.done [#allocation9], 18432
        $region40: #{tpu_custom_call.1} parent=31 // pred_fallthru
          _
        // Predicated region
        $region41: #{tpu_custom_call.1} parent=31 // pred_check
          %p202 = pneg %p84
        $region42: #{tpu_custom_call.1} parent=31 // pred_check_branch
          %204 = sbr.rel (%p202) target = $region44
        $region43: #{tpu_custom_call.1} parent=31 // pred_region
          %206 = dma.done [#allocation9], 48
        $region44: #{tpu_custom_call.1} parent=31 // pred_fallthru
          _
        %s207 = sand.u32 %s29, 1
        %s208 = scalar_lea.sflag [#allocation6], %s207
        %s209 = sand.u32 %s29, 1
        %s210 = smul.addr %s209, 32
        %s211 = scalar_lea.vmem [#allocation5], %s210
        %p212 = pneg %p42
        %p213 = pneg %p39
        %p214 = pneg %p63
        %p215 = pneg %p60
        %p216 = pneg %p84
        %p217 = pneg %p81
        %p218 = pneg %p110
        %p219 = pneg %p107
        %s220 = sand.u32 %s97, 1
        %s221 = scalar_lea.sflag [#allocation7], %s220
        %s222 = sand.u32 %s97, 1
        %s223 = smul.addr %s222, 32
        %s224 = scalar_lea.vmem [#allocation11], %s223
        %s225 = smul.u32 2, %s21
        %s226 = smul.u32 2, %s21
        %227 = vst [vmem:[#allocation2] sm:$0x1] 0.0
        %228 = vst [vmem:[#allocation2 + $0x18] sm:$0x1] 0.0
        %229 = vst [vmem:[#allocation2 + $0x11] sm:$0x1] 0.0
        %230 = vst [vmem:[#allocation2 + $0x29] sm:$0x1] 0.0
        %231 = vst [vmem:[#allocation3] sm:$0x1] 0.0
        %232 = vst [vmem:[#allocation3 + $0x18] sm:$0x1] 0.0
        %233 = vst [vmem:[#allocation3 + $0x11] sm:$0x1] 0.0
        %234 = vst [vmem:[#allocation3 + $0x29] sm:$0x1] 0.0
        %v235 = vld [vmem:[%s191] sm:$0xff]
        %v236 = vld [vmem:[%s191 + $0x8] sm:$0xff]
        %v237 = vld [vmem:[%s191 + $0x10] sm:$0xff]
        %v238 = vld [vmem:[%s191 + $0x18] sm:$0xff]
        %239 = vst [vmem:[#allocation2 + $0x1] sm:$0xff] %v235
        %240 = vst [vmem:[#allocation2 + $0x9] sm:$0xff] %v236
        %241 = vst [vmem:[#allocation2 + $0x19] sm:$0xff] %v237
        %242 = vst [vmem:[#allocation2 + $0x21] sm:$0xff] %v238
        %v243 = vld [vmem:[#allocation2] sm:$0xff]
        %v244 = vld [vmem:[#allocation2 + $0x8] sm:$0xff]
        %245 = vst [vmem:[#allocation4] sm:$0xff] %v243
        %246 = vst [vmem:[#allocation4 + $0x18] sm:$0xff] %v244
        %v247 = vld [vmem:[#allocation2 + $0x1] sm:$0xff]
        %v248 = vld [vmem:[#allocation2 + $0x9] sm:$0xff]
        %249 = vst [vmem:[#allocation4 + $0x8] sm:$0xff] %v247
        %250 = vst [vmem:[#allocation4 + $0x20] sm:$0xff] %v248
        %v251 = vld [vmem:[#allocation2 + $0x2] sm:$0xff]
        %v252 = vld [vmem:[#allocation2 + $0xa] sm:$0xff]
        %253 = vst [vmem:[#allocation4 + $0x10] sm:$0xff] %v251
        %254 = vst [vmem:[#allocation4 + $0x28] sm:$0xff] %v252
        %s255 = scalar_lea.vmem [#allocation2], 24
        %v256 = vld [vmem:[%s255] sm:$0xff]
        %v257 = vld [vmem:[%s255 + $0x8] sm:$0xff]
        %258 = vst [vmem:[#allocation4 + $0x30] sm:$0xff] %v256
        %259 = vst [vmem:[#allocation4 + $0x48] sm:$0xff] %v257
        %v260 = vld [vmem:[%s255 + $0x1] sm:$0xff]
        %v261 = vld [vmem:[%s255 + $0x9] sm:$0xff]
        %262 = vst [vmem:[#allocation4 + $0x38] sm:$0xff] %v260
        %263 = vst [vmem:[#allocation4 + $0x50] sm:$0xff] %v261
        %v264 = vld [vmem:[%s255 + $0x2] sm:$0xff]
        %v265 = vld [vmem:[%s255 + $0xa] sm:$0xff]
        %266 = vst [vmem:[#allocation4 + $0x40] sm:$0xff] %v264
        %267 = vst [vmem:[#allocation4 + $0x58] sm:$0xff] %v265
        %v268 = vld [vmem:[#allocation4] sm:$0xff]
        %v269 = vld [vmem:[#allocation4 + $0x8] sm:$0xff]
        %v270 = vld [vmem:[#allocation4 + $0x10] sm:$0xff]
        %v271 = vld [vmem:[#allocation4 + $0x18] sm:$0xff]
        %v272 = vld [vmem:[#allocation4 + $0x20] sm:$0xff]
        %v273 = vld [vmem:[#allocation4 + $0x28] sm:$0xff]
        %v274 = vld [vmem:[#allocation4 + $0x30] sm:$0xff]
        %v275 = vld [vmem:[#allocation4 + $0x38] sm:$0xff]
        %v276 = vld [vmem:[#allocation4 + $0x40] sm:$0xff]
        %v277 = vld [vmem:[#allocation4 + $0x48] sm:$0xff]
        %v278 = vld [vmem:[#allocation4 + $0x50] sm:$0xff]
        %v279 = vld [vmem:[#allocation4 + $0x58] sm:$0xff]
        %v280 = vld [vmem:[#allocation8] sm:$0xff]
        %v281 = vld [vmem:[#allocation8 + $0x8] sm:$0xff]
        %v282 = vld [vmem:[#allocation8 + $0x10] sm:$0xff]
        %v283 = vld [vmem:[#allocation8 + $0x18] sm:$0xff]
        %v284 = vld [vmem:[#allocation8 + $0x20] sm:$0xff]
        %v285 = vld [vmem:[#allocation8 + $0x28] sm:$0xff]
        %v286 = vld [vmem:[#allocation8 + $0x30] sm:$0xff]
        %v287 = vld [vmem:[#allocation8 + $0x38] sm:$0xff]
        %v288 = vld [vmem:[#allocation8 + $0x40] sm:$0xff]
        %v289 = vld [vmem:[#allocation8 + $0x48] sm:$0xff]
        %v290 = vld [vmem:[#allocation8 + $0x50] sm:$0xff]
        %v291 = vld [vmem:[#allocation8 + $0x58] sm:$0xff]
        %v292 = vld [vmem:[#allocation8 + $0x60] sm:$0xff]
        %v293 = vld [vmem:[#allocation8 + $0x68] sm:$0xff]
        %v294 = vld [vmem:[#allocation8 + $0x70] sm:$0xff]
        %v295 = vld [vmem:[#allocation8 + $0x78] sm:$0xff]
        %v296 = vld [vmem:[#allocation8 + $0x80] sm:$0xff]
        %v297 = vld [vmem:[#allocation8 + $0x88] sm:$0xff]
        %v298 = vld [vmem:[#allocation8 + $0x90] sm:$0xff]
        %v299 = vld [vmem:[#allocation8 + $0x98] sm:$0xff]
        %v300 = vld [vmem:[#allocation8 + $0xa0] sm:$0xff]
        %v301 = vld [vmem:[#allocation8 + $0xa8] sm:$0xff]
        %v302 = vld [vmem:[#allocation8 + $0xb0] sm:$0xff]
        %v303 = vld [vmem:[#allocation8 + $0xb8] sm:$0xff]
        %v304 = vld [vmem:[#allocation8 + $0xc0] sm:$0xff]
        %v305 = vld [vmem:[#allocation8 + $0xc8] sm:$0xff]
        %v306 = vld [vmem:[#allocation8 + $0xd0] sm:$0xff]
        %v307 = vld [vmem:[#allocation8 + $0xd8] sm:$0xff]
        %v308 = vld [vmem:[#allocation8 + $0xe0] sm:$0xff]
        %v309 = vld [vmem:[#allocation8 + $0xe8] sm:$0xff]
        %v310 = vld [vmem:[#allocation8 + $0xf0] sm:$0xff]
        %v311 = vld [vmem:[#allocation8 + $0xf8] sm:$0xff]
        %v312 = vld [vmem:[#allocation8 + $0x100] sm:$0xff]
        %v313 = vld [vmem:[#allocation8 + $0x108] sm:$0xff]
        %v314 = vld [vmem:[#allocation8 + $0x110] sm:$0xff]
        %v315 = vld [vmem:[#allocation8 + $0x118] sm:$0xff]
        %v316 = vld [vmem:[#allocation8 + $0x120] sm:$0xff]
        %v317 = vld [vmem:[#allocation8 + $0x128] sm:$0xff]
        %v318 = vld [vmem:[#allocation8 + $0x130] sm:$0xff]
        %v319 = vld [vmem:[#allocation8 + $0x138] sm:$0xff]
        %v320 = vld [vmem:[#allocation8 + $0x140] sm:$0xff]
        %v321 = vld [vmem:[#allocation8 + $0x148] sm:$0xff]
        %v322 = vld [vmem:[#allocation8 + $0x150] sm:$0xff]
        %v323 = vld [vmem:[#allocation8 + $0x158] sm:$0xff]
        %v324 = vld [vmem:[#allocation8 + $0x160] sm:$0xff]
        %v325 = vld [vmem:[#allocation8 + $0x168] sm:$0xff]
        %v326 = vld [vmem:[#allocation8 + $0x170] sm:$0xff]
        %v327 = vld [vmem:[#allocation8 + $0x178] sm:$0xff]
        %v328 = vld [vmem:[#allocation10] sm:$0x1]
        %v330 = vperm.slane %v328, 0
        %332 = vmatpush.msra.mxu0 %v295
        %333 = vmatpush.msra.mxu0 %v294
        %334 = vmatpush.msra.mxu0 %v293
        %335 = vmatpush.msra.mxu0 %v292
        %336 = vmatpush.msra.mxu0 %v291
        %337 = vmatpush.msra.mxu0 %v290
        %338 = vmatpush.msra.mxu0 %v289
        %339 = vmatpush.msra.mxu0 %v288
        %340 = vmatpush.msra.mxu0 %v287
        %341 = vmatpush.msra.mxu0 %v286
        %342 = vmatpush.msra.mxu0 %v285
        %343 = vmatpush.msra.mxu0 %v284
        %344 = vmatpush.msra.mxu0 %v283
        %345 = vmatpush.msra.mxu0 %v282
        %346 = vmatpush.msra.mxu0 %v281
        %347 = vmatpush.msra.mxu0 %v280
        %348 = vmatmul.f32.gmra.mxu0 %v268
        %v349 = vpop.f32.mrf.mxu0
        %v350 = vadd.f32 %v330, %v349
        %351 = vmatmul.f32.gmra.mxu0 %v271
        %v352 = vpop.f32.mrf.mxu0
        %v353 = vadd.f32 %v330, %v352
        %354 = vmatmul.f32.gmra.mxu0 %v274
        %v355 = vpop.f32.mrf.mxu0
        %v356 = vadd.f32 %v330, %v355
        %357 = vmatmul.f32.gmra.mxu0 %v277
        %v358 = vpop.f32.mrf.mxu0
        %v359 = vadd.f32 %v330, %v358
        %360 = vdwg.mxu0
        %361 = vmatpush.msra.mxu0 %v311
        %362 = vmatpush.msra.mxu0 %v310
        %363 = vmatpush.msra.mxu0 %v309
        %364 = vmatpush.msra.mxu0 %v308
        %365 = vmatpush.msra.mxu0 %v307
        %366 = vmatpush.msra.mxu0 %v306
        %367 = vmatpush.msra.mxu0 %v305
        %368 = vmatpush.msra.mxu0 %v304
        %369 = vmatpush.msra.mxu0 %v303
        %370 = vmatpush.msra.mxu0 %v302
        %371 = vmatpush.msra.mxu0 %v301
        %372 = vmatpush.msra.mxu0 %v300
        %373 = vmatpush.msra.mxu0 %v299
        %374 = vmatpush.msra.mxu0 %v298
        %375 = vmatpush.msra.mxu0 %v297
        %376 = vmatpush.msra.mxu0 %v296
        %377 = vmatmul.f32.gmra.mxu0 %v269
        %v378 = vpop.f32.mrf.mxu0
        %v379 = vadd.f32 %v350, %v378
        %380 = vmatmul.f32.gmra.mxu0 %v272
        %v381 = vpop.f32.mrf.mxu0
        %v382 = vadd.f32 %v353, %v381
        %383 = vmatmul.f32.gmra.mxu0 %v275
        %v384 = vpop.f32.mrf.mxu0
        %v385 = vadd.f32 %v356, %v384
        %386 = vmatmul.f32.gmra.mxu0 %v278
        %v387 = vpop.f32.mrf.mxu0
        %v388 = vadd.f32 %v359, %v387
        %389 = vdwg.mxu0
        %390 = vmatpush.msra.mxu0 %v327
        %391 = vmatpush.msra.mxu0 %v326
        %392 = vmatpush.msra.mxu0 %v325
        %393 = vmatpush.msra.mxu0 %v324
        %394 = vmatpush.msra.mxu0 %v323
        %395 = vmatpush.msra.mxu0 %v322
        %396 = vmatpush.msra.mxu0 %v321
        %397 = vmatpush.msra.mxu0 %v320
        %398 = vmatpush.msra.mxu0 %v319
        %399 = vmatpush.msra.mxu0 %v318
        %400 = vmatpush.msra.mxu0 %v317
        %401 = vmatpush.msra.mxu0 %v316
        %402 = vmatpush.msra.mxu0 %v315
        %403 = vmatpush.msra.mxu0 %v314
        %404 = vmatpush.msra.mxu0 %v313
        %405 = vmatpush.msra.mxu0 %v312
        %406 = vmatmul.f32.gmra.mxu0 %v270
        %v407 = vpop.f32.mrf.mxu0
        %v408 = vadd.f32 %v379, %v407
        %409 = vmatmul.f32.gmra.mxu0 %v273
        %v410 = vpop.f32.mrf.mxu0
        %v411 = vadd.f32 %v382, %v410
        %412 = vmatmul.f32.gmra.mxu0 %v276
        %v413 = vpop.f32.mrf.mxu0
        %v414 = vadd.f32 %v385, %v413
        %415 = vmatmul.f32.gmra.mxu0 %v279
        %v416 = vpop.f32.mrf.mxu0
        %v417 = vadd.f32 %v388, %v416
        %418 = vdwg.mxu0
        %v419 = vmax.f32 %v408, 0.0
        %v420 = vmax.f32 %v411, 0.0
        %v421 = vmax.f32 %v414, 0.0
        %v422 = vmax.f32 %v417, 0.0
        %423 = vst [vmem:[#allocation3 + $0x1] sm:$0xff] %v419
        %424 = vst [vmem:[#allocation3 + $0x9] sm:$0xff] %v420
        %s425 = scalar_lea.vmem [#allocation3], 24
        %426 = vst [vmem:[%s425 + $0x1] sm:$0xff] %v421
        %427 = vst [vmem:[%s425 + $0x9] sm:$0xff] %v422
        %v428 = vld [vmem:[#allocation3] sm:$0xff]
        %v429 = vld [vmem:[#allocation3 + $0x8] sm:$0xff]
        %430 = vst [vmem:[#allocation4] sm:$0xff] %v428
        %431 = vst [vmem:[#allocation4 + $0x18] sm:$0xff] %v429
        %v432 = vld [vmem:[#allocation3 + $0x1] sm:$0xff]
        %v433 = vld [vmem:[#allocation3 + $0x9] sm:$0xff]
        %434 = vst [vmem:[#allocation4 + $0x8] sm:$0xff] %v432
        %435 = vst [vmem:[#allocation4 + $0x20] sm:$0xff] %v433
        %v436 = vld [vmem:[#allocation3 + $0x2] sm:$0xff]
        %v437 = vld [vmem:[#allocation3 + $0xa] sm:$0xff]
        %438 = vst [vmem:[#allocation4 + $0x10] sm:$0xff] %v436
        %439 = vst [vmem:[#allocation4 + $0x28] sm:$0xff] %v437
        %v440 = vld [vmem:[%s425] sm:$0xff]
        %v441 = vld [vmem:[%s425 + $0x8] sm:$0xff]
        %442 = vst [vmem:[#allocation4 + $0x30] sm:$0xff] %v440
        %443 = vst [vmem:[#allocation4 + $0x48] sm:$0xff] %v441
        %v444 = vld [vmem:[%s425 + $0x1] sm:$0xff]
        %v445 = vld [vmem:[%s425 + $0x9] sm:$0xff]
        %446 = vst [vmem:[#allocation4 + $0x38] sm:$0xff] %v444
        %447 = vst [vmem:[#allocation4 + $0x50] sm:$0xff] %v445
        %v448 = vld [vmem:[%s425 + $0x2] sm:$0xff]
        %v449 = vld [vmem:[%s425 + $0xa] sm:$0xff]
        %450 = vst [vmem:[#allocation4 + $0x40] sm:$0xff] %v448
        %451 = vst [vmem:[#allocation4 + $0x58] sm:$0xff] %v449
        %v452 = vld [vmem:[#allocation4] sm:$0xff]
        %v453 = vld [vmem:[#allocation4 + $0x8] sm:$0xff]
        %v454 = vld [vmem:[#allocation4 + $0x10] sm:$0xff]
        %v455 = vld [vmem:[#allocation4 + $0x18] sm:$0xff]
        %v456 = vld [vmem:[#allocation4 + $0x20] sm:$0xff]
        %v457 = vld [vmem:[#allocation4 + $0x28] sm:$0xff]
        %v458 = vld [vmem:[#allocation4 + $0x30] sm:$0xff]
        %v459 = vld [vmem:[#allocation4 + $0x38] sm:$0xff]
        %v460 = vld [vmem:[#allocation4 + $0x40] sm:$0xff]
        %v461 = vld [vmem:[#allocation4 + $0x48] sm:$0xff]
        %v462 = vld [vmem:[#allocation4 + $0x50] sm:$0xff]
        %v463 = vld [vmem:[#allocation4 + $0x58] sm:$0xff]
        %s464 = scalar_lea.vmem [#allocation8], 384
        %v465 = vld [vmem:[%s464] sm:$0xff]
        %v466 = vld [vmem:[%s464 + $0x8] sm:$0xff]
        %v467 = vld [vmem:[%s464 + $0x10] sm:$0xff]
        %v468 = vld [vmem:[%s464 + $0x18] sm:$0xff]
        %v469 = vld [vmem:[%s464 + $0x20] sm:$0xff]
        %v470 = vld [vmem:[%s464 + $0x28] sm:$0xff]
        %v471 = vld [vmem:[%s464 + $0x30] sm:$0xff]
        %v472 = vld [vmem:[%s464 + $0x38] sm:$0xff]
        %v473 = vld [vmem:[%s464 + $0x40] sm:$0xff]
        %v474 = vld [vmem:[%s464 + $0x48] sm:$0xff]
        %v475 = vld [vmem:[%s464 + $0x50] sm:$0xff]
        %v476 = vld [vmem:[%s464 + $0x58] sm:$0xff]
        %v477 = vld [vmem:[%s464 + $0x60] sm:$0xff]
        %v478 = vld [vmem:[%s464 + $0x68] sm:$0xff]
        %v479 = vld [vmem:[%s464 + $0x70] sm:$0xff]
        %v480 = vld [vmem:[%s464 + $0x78] sm:$0xff]
        %v481 = vld [vmem:[%s464 + $0x80] sm:$0xff]
        %v482 = vld [vmem:[%s464 + $0x88] sm:$0xff]
        %v483 = vld [vmem:[%s464 + $0x90] sm:$0xff]
        %v484 = vld [vmem:[%s464 + $0x98] sm:$0xff]
        %v485 = vld [vmem:[%s464 + $0xa0] sm:$0xff]
        %v486 = vld [vmem:[%s464 + $0xa8] sm:$0xff]
        %v487 = vld [vmem:[%s464 + $0xb0] sm:$0xff]
        %v488 = vld [vmem:[%s464 + $0xb8] sm:$0xff]
        %v489 = vld [vmem:[%s464 + $0xc0] sm:$0xff]
        %v490 = vld [vmem:[%s464 + $0xc8] sm:$0xff]
        %v491 = vld [vmem:[%s464 + $0xd0] sm:$0xff]
        %v492 = vld [vmem:[%s464 + $0xd8] sm:$0xff]
        %v493 = vld [vmem:[%s464 + $0xe0] sm:$0xff]
        %v494 = vld [vmem:[%s464 + $0xe8] sm:$0xff]
        %v495 = vld [vmem:[%s464 + $0xf0] sm:$0xff]
        %v496 = vld [vmem:[%s464 + $0xf8] sm:$0xff]
        %v497 = vld [vmem:[%s464 + $0x100] sm:$0xff]
        %v498 = vld [vmem:[%s464 + $0x108] sm:$0xff]
        %v499 = vld [vmem:[%s464 + $0x110] sm:$0xff]
        %v500 = vld [vmem:[%s464 + $0x118] sm:$0xff]
        %v501 = vld [vmem:[%s464 + $0x120] sm:$0xff]
        %v502 = vld [vmem:[%s464 + $0x128] sm:$0xff]
        %v503 = vld [vmem:[%s464 + $0x130] sm:$0xff]
        %v504 = vld [vmem:[%s464 + $0x138] sm:$0xff]
        %v505 = vld [vmem:[%s464 + $0x140] sm:$0xff]
        %v506 = vld [vmem:[%s464 + $0x148] sm:$0xff]
        %v507 = vld [vmem:[%s464 + $0x150] sm:$0xff]
        %v508 = vld [vmem:[%s464 + $0x158] sm:$0xff]
        %v509 = vld [vmem:[%s464 + $0x160] sm:$0xff]
        %v510 = vld [vmem:[%s464 + $0x168] sm:$0xff]
        %v511 = vld [vmem:[%s464 + $0x170] sm:$0xff]
        %v512 = vld [vmem:[%s464 + $0x178] sm:$0xff]
        %s513 = scalar_lea.vmem [#allocation10], 1
        %v514 = vld [vmem:[%s513] sm:$0x1]
        %v516 = vperm.slane %v514, 0
        %518 = vmatpush.msra.mxu0 %v480
        %519 = vmatpush.msra.mxu0 %v479
        %520 = vmatpush.msra.mxu0 %v478
        %521 = vmatpush.msra.mxu0 %v477
        %522 = vmatpush.msra.mxu0 %v476
        %523 = vmatpush.msra.mxu0 %v475
        %524 = vmatpush.msra.mxu0 %v474
        %525 = vmatpush.msra.mxu0 %v473
        %526 = vmatpush.msra.mxu0 %v472
        %527 = vmatpush.msra.mxu0 %v471
        %528 = vmatpush.msra.mxu0 %v470
        %529 = vmatpush.msra.mxu0 %v469
        %530 = vmatpush.msra.mxu0 %v468
        %531 = vmatpush.msra.mxu0 %v467
        %532 = vmatpush.msra.mxu0 %v466
        %533 = vmatpush.msra.mxu0 %v465
        %534 = vmatmul.f32.gmra.mxu0 %v452
        %v535 = vpop.f32.mrf.mxu0
        %v536 = vadd.f32 %v516, %v535
        %537 = vmatmul.f32.gmra.mxu0 %v455
        %v538 = vpop.f32.mrf.mxu0
        %v539 = vadd.f32 %v516, %v538
        %540 = vmatmul.f32.gmra.mxu0 %v458
        %v541 = vpop.f32.mrf.mxu0
        %v542 = vadd.f32 %v516, %v541
        %543 = vmatmul.f32.gmra.mxu0 %v461
        %v544 = vpop.f32.mrf.mxu0
        %v545 = vadd.f32 %v516, %v544
        %546 = vdwg.mxu0
        %547 = vmatpush.msra.mxu0 %v496
        %548 = vmatpush.msra.mxu0 %v495
        %549 = vmatpush.msra.mxu0 %v494
        %550 = vmatpush.msra.mxu0 %v493
        %551 = vmatpush.msra.mxu0 %v492
        %552 = vmatpush.msra.mxu0 %v491
        %553 = vmatpush.msra.mxu0 %v490
        %554 = vmatpush.msra.mxu0 %v489
        %555 = vmatpush.msra.mxu0 %v488
        %556 = vmatpush.msra.mxu0 %v487
        %557 = vmatpush.msra.mxu0 %v486
        %558 = vmatpush.msra.mxu0 %v485
        %559 = vmatpush.msra.mxu0 %v484
        %560 = vmatpush.msra.mxu0 %v483
        %561 = vmatpush.msra.mxu0 %v482
        %562 = vmatpush.msra.mxu0 %v481
        %563 = vmatmul.f32.gmra.mxu0 %v453
        %v564 = vpop.f32.mrf.mxu0
        %v565 = vadd.f32 %v536, %v564
        %566 = vmatmul.f32.gmra.mxu0 %v456
        %v567 = vpop.f32.mrf.mxu0
        %v568 = vadd.f32 %v539, %v567
        %569 = vmatmul.f32.gmra.mxu0 %v459
        %v570 = vpop.f32.mrf.mxu0
        %v571 = vadd.f32 %v542, %v570
        %572 = vmatmul.f32.gmra.mxu0 %v462
        %v573 = vpop.f32.mrf.mxu0
        %v574 = vadd.f32 %v545, %v573
        %575 = vdwg.mxu0
        %576 = vmatpush.msra.mxu0 %v512
        %577 = vmatpush.msra.mxu0 %v511
        %578 = vmatpush.msra.mxu0 %v510
        %579 = vmatpush.msra.mxu0 %v509
        %580 = vmatpush.msra.mxu0 %v508
        %581 = vmatpush.msra.mxu0 %v507
        %582 = vmatpush.msra.mxu0 %v506
        %583 = vmatpush.msra.mxu0 %v505
        %584 = vmatpush.msra.mxu0 %v504
        %585 = vmatpush.msra.mxu0 %v503
        %586 = vmatpush.msra.mxu0 %v502
        %587 = vmatpush.msra.mxu0 %v501
        %588 = vmatpush.msra.mxu0 %v500
        %589 = vmatpush.msra.mxu0 %v499
        %590 = vmatpush.msra.mxu0 %v498
        %591 = vmatpush.msra.mxu0 %v497
        %592 = vmatmul.f32.gmra.mxu0 %v454
        %v593 = vpop.f32.mrf.mxu0
        %v594 = vadd.f32 %v565, %v593
        %595 = vmatmul.f32.gmra.mxu0 %v457
        %v596 = vpop.f32.mrf.mxu0
        %v597 = vadd.f32 %v568, %v596
        %598 = vmatmul.f32.gmra.mxu0 %v460
        %v599 = vpop.f32.mrf.mxu0
        %v600 = vadd.f32 %v571, %v599
        %601 = vmatmul.f32.gmra.mxu0 %v463
        %v602 = vpop.f32.mrf.mxu0
        %v603 = vadd.f32 %v574, %v602
        %604 = vdwg.mxu0
        %v605 = vmax.f32 %v594, 0.0
        %v606 = vmax.f32 %v597, 0.0
        %v607 = vmax.f32 %v600, 0.0
        %v608 = vmax.f32 %v603, 0.0
        %609 = vst [vmem:[#allocation2 + $0x1] sm:$0xff] %v605
        %610 = vst [vmem:[#allocation2 + $0x9] sm:$0xff] %v606
        %611 = vst [vmem:[%s255 + $0x1] sm:$0xff] %v607
        %612 = vst [vmem:[%s255 + $0x9] sm:$0xff] %v608
        %v613 = vld [vmem:[#allocation2] sm:$0xff]
        %v614 = vld [vmem:[#allocation2 + $0x8] sm:$0xff]
        %615 = vst [vmem:[#allocation4] sm:$0xff] %v613
        %616 = vst [vmem:[#allocation4 + $0x18] sm:$0xff] %v614
        %v617 = vld [vmem:[#allocation2 + $0x1] sm:$0xff]
        %v618 = vld [vmem:[#allocation2 + $0x9] sm:$0xff]
        %619 = vst [vmem:[#allocation4 + $0x8] sm:$0xff] %v617
        %620 = vst [vmem:[#allocation4 + $0x20] sm:$0xff] %v618
        %v621 = vld [vmem:[#allocation2 + $0x2] sm:$0xff]
        %v622 = vld [vmem:[#allocation2 + $0xa] sm:$0xff]
        %623 = vst [vmem:[#allocation4 + $0x10] sm:$0xff] %v621
        %624 = vst [vmem:[#allocation4 + $0x28] sm:$0xff] %v622
        %v625 = vld [vmem:[%s255] sm:$0xff]
        %v626 = vld [vmem:[%s255 + $0x8] sm:$0xff]
        %627 = vst [vmem:[#allocation4 + $0x30] sm:$0xff] %v625
        %628 = vst [vmem:[#allocation4 + $0x48] sm:$0xff] %v626
        %v629 = vld [vmem:[%s255 + $0x1] sm:$0xff]
        %v630 = vld [vmem:[%s255 + $0x9] sm:$0xff]
        %631 = vst [vmem:[#allocation4 + $0x38] sm:$0xff] %v629
        %632 = vst [vmem:[#allocation4 + $0x50] sm:$0xff] %v630
        %v633 = vld [vmem:[%s255 + $0x2] sm:$0xff]
        %v634 = vld [vmem:[%s255 + $0xa] sm:$0xff]
        %635 = vst [vmem:[#allocation4 + $0x40] sm:$0xff] %v633
        %636 = vst [vmem:[#allocation4 + $0x58] sm:$0xff] %v634
        %v637 = vld [vmem:[#allocation4] sm:$0xff]
        %v638 = vld [vmem:[#allocation4 + $0x8] sm:$0xff]
        %v639 = vld [vmem:[#allocation4 + $0x10] sm:$0xff]
        %v640 = vld [vmem:[#allocation4 + $0x18] sm:$0xff]
        %v641 = vld [vmem:[#allocation4 + $0x20] sm:$0xff]
        %v642 = vld [vmem:[#allocation4 + $0x28] sm:$0xff]
        %v643 = vld [vmem:[#allocation4 + $0x30] sm:$0xff]
        %v644 = vld [vmem:[#allocation4 + $0x38] sm:$0xff]
        %v645 = vld [vmem:[#allocation4 + $0x40] sm:$0xff]
        %v646 = vld [vmem:[#allocation4 + $0x48] sm:$0xff]
        %v647 = vld [vmem:[#allocation4 + $0x50] sm:$0xff]
        %v648 = vld [vmem:[#allocation4 + $0x58] sm:$0xff]
        %s649 = scalar_lea.vmem [#allocation8], 768
        %v650 = vld [vmem:[%s649] sm:$0xff]
        %v651 = vld [vmem:[%s649 + $0x8] sm:$0xff]
        %v652 = vld [vmem:[%s649 + $0x10] sm:$0xff]
        %v653 = vld [vmem:[%s649 + $0x18] sm:$0xff]
        %v654 = vld [vmem:[%s649 + $0x20] sm:$0xff]
        %v655 = vld [vmem:[%s649 + $0x28] sm:$0xff]
        %v656 = vld [vmem:[%s649 + $0x30] sm:$0xff]
        %v657 = vld [vmem:[%s649 + $0x38] sm:$0xff]
        %v658 = vld [vmem:[%s649 + $0x40] sm:$0xff]
        %v659 = vld [vmem:[%s649 + $0x48] sm:$0xff]
        %v660 = vld [vmem:[%s649 + $0x50] sm:$0xff]
        %v661 = vld [vmem:[%s649 + $0x58] sm:$0xff]
        %v662 = vld [vmem:[%s649 + $0x60] sm:$0xff]
        %v663 = vld [vmem:[%s649 + $0x68] sm:$0xff]
        %v664 = vld [vmem:[%s649 + $0x70] sm:$0xff]
        %v665 = vld [vmem:[%s649 + $0x78] sm:$0xff]
        %v666 = vld [vmem:[%s649 + $0x80] sm:$0xff]
        %v667 = vld [vmem:[%s649 + $0x88] sm:$0xff]
        %v668 = vld [vmem:[%s649 + $0x90] sm:$0xff]
        %v669 = vld [vmem:[%s649 + $0x98] sm:$0xff]
        %v670 = vld [vmem:[%s649 + $0xa0] sm:$0xff]
        %v671 = vld [vmem:[%s649 + $0xa8] sm:$0xff]
        %v672 = vld [vmem:[%s649 + $0xb0] sm:$0xff]
        %v673 = vld [vmem:[%s649 + $0xb8] sm:$0xff]
        %v674 = vld [vmem:[%s649 + $0xc0] sm:$0xff]
        %v675 = vld [vmem:[%s649 + $0xc8] sm:$0xff]
        %v676 = vld [vmem:[%s649 + $0xd0] sm:$0xff]
        %v677 = vld [vmem:[%s649 + $0xd8] sm:$0xff]
        %v678 = vld [vmem:[%s649 + $0xe0] sm:$0xff]
        %v679 = vld [vmem:[%s649 + $0xe8] sm:$0xff]
        %v680 = vld [vmem:[%s649 + $0xf0] sm:$0xff]
        %v681 = vld [vmem:[%s649 + $0xf8] sm:$0xff]
        %v682 = vld [vmem:[%s649 + $0x100] sm:$0xff]
        %v683 = vld [vmem:[%s649 + $0x108] sm:$0xff]
        %v684 = vld [vmem:[%s649 + $0x110] sm:$0xff]
        %v685 = vld [vmem:[%s649 + $0x118] sm:$0xff]
        %v686 = vld [vmem:[%s649 + $0x120] sm:$0xff]
        %v687 = vld [vmem:[%s649 + $0x128] sm:$0xff]
        %v688 = vld [vmem:[%s649 + $0x130] sm:$0xff]
        %v689 = vld [vmem:[%s649 + $0x138] sm:$0xff]
        %v690 = vld [vmem:[%s649 + $0x140] sm:$0xff]
        %v691 = vld [vmem:[%s649 + $0x148] sm:$0xff]
        %v692 = vld [vmem:[%s649 + $0x150] sm:$0xff]
        %v693 = vld [vmem:[%s649 + $0x158] sm:$0xff]
        %v694 = vld [vmem:[%s649 + $0x160] sm:$0xff]
        %v695 = vld [vmem:[%s649 + $0x168] sm:$0xff]
        %v696 = vld [vmem:[%s649 + $0x170] sm:$0xff]
        %v697 = vld [vmem:[%s649 + $0x178] sm:$0xff]
        %s698 = scalar_lea.vmem [#allocation10], 2
        %v699 = vld [vmem:[%s698] sm:$0x1]
        %v701 = vperm.slane %v699, 0
        %703 = vmatpush.msra.mxu0 %v665
        %704 = vmatpush.msra.mxu0 %v664
        %705 = vmatpush.msra.mxu0 %v663
        %706 = vmatpush.msra.mxu0 %v662
        %707 = vmatpush.msra.mxu0 %v661
        %708 = vmatpush.msra.mxu0 %v660
        %709 = vmatpush.msra.mxu0 %v659
        %710 = vmatpush.msra.mxu0 %v658
        %711 = vmatpush.msra.mxu0 %v657
        %712 = vmatpush.msra.mxu0 %v656
        %713 = vmatpush.msra.mxu0 %v655
        %714 = vmatpush.msra.mxu0 %v654
        %715 = vmatpush.msra.mxu0 %v653
        %716 = vmatpush.msra.mxu0 %v652
        %717 = vmatpush.msra.mxu0 %v651
        %718 = vmatpush.msra.mxu0 %v650
        %719 = vmatmul.f32.gmra.mxu0 %v637
        %v720 = vpop.f32.mrf.mxu0
        %v721 = vadd.f32 %v701, %v720
        %722 = vmatmul.f32.gmra.mxu0 %v640
        %v723 = vpop.f32.mrf.mxu0
        %v724 = vadd.f32 %v701, %v723
        %725 = vmatmul.f32.gmra.mxu0 %v643
        %v726 = vpop.f32.mrf.mxu0
        %v727 = vadd.f32 %v701, %v726
        %728 = vmatmul.f32.gmra.mxu0 %v646
        %v729 = vpop.f32.mrf.mxu0
        %v730 = vadd.f32 %v701, %v729
        %731 = vdwg.mxu0
        %732 = vmatpush.msra.mxu0 %v681
        %733 = vmatpush.msra.mxu0 %v680
        %734 = vmatpush.msra.mxu0 %v679
        %735 = vmatpush.msra.mxu0 %v678
        %736 = vmatpush.msra.mxu0 %v677
        %737 = vmatpush.msra.mxu0 %v676
        %738 = vmatpush.msra.mxu0 %v675
        %739 = vmatpush.msra.mxu0 %v674
        %740 = vmatpush.msra.mxu0 %v673
        %741 = vmatpush.msra.mxu0 %v672
        %742 = vmatpush.msra.mxu0 %v671
        %743 = vmatpush.msra.mxu0 %v670
        %744 = vmatpush.msra.mxu0 %v669
        %745 = vmatpush.msra.mxu0 %v668
        %746 = vmatpush.msra.mxu0 %v667
        %747 = vmatpush.msra.mxu0 %v666
        %748 = vmatmul.f32.gmra.mxu0 %v638
        %v749 = vpop.f32.mrf.mxu0
        %v750 = vadd.f32 %v721, %v749
        %751 = vmatmul.f32.gmra.mxu0 %v641
        %v752 = vpop.f32.mrf.mxu0
        %v753 = vadd.f32 %v724, %v752
        %754 = vmatmul.f32.gmra.mxu0 %v644
        %v755 = vpop.f32.mrf.mxu0
        %v756 = vadd.f32 %v727, %v755
        %757 = vmatmul.f32.gmra.mxu0 %v647
        %v758 = vpop.f32.mrf.mxu0
        %v759 = vadd.f32 %v730, %v758
        %760 = vdwg.mxu0
        %761 = vmatpush.msra.mxu0 %v697
        %762 = vmatpush.msra.mxu0 %v696
        %763 = vmatpush.msra.mxu0 %v695
        %764 = vmatpush.msra.mxu0 %v694
        %765 = vmatpush.msra.mxu0 %v693
        %766 = vmatpush.msra.mxu0 %v692
        %767 = vmatpush.msra.mxu0 %v691
        %768 = vmatpush.msra.mxu0 %v690
        %769 = vmatpush.msra.mxu0 %v689
        %770 = vmatpush.msra.mxu0 %v688
        %771 = vmatpush.msra.mxu0 %v687
        %772 = vmatpush.msra.mxu0 %v686
        %773 = vmatpush.msra.mxu0 %v685
        %774 = vmatpush.msra.mxu0 %v684
        %775 = vmatpush.msra.mxu0 %v683
        %776 = vmatpush.msra.mxu0 %v682
        %777 = vmatmul.f32.gmra.mxu0 %v639
        %v778 = vpop.f32.mrf.mxu0
        %v779 = vadd.f32 %v750, %v778
        %780 = vmatmul.f32.gmra.mxu0 %v642
        %v781 = vpop.f32.mrf.mxu0
        %v782 = vadd.f32 %v753, %v781
        %783 = vmatmul.f32.gmra.mxu0 %v645
        %v784 = vpop.f32.mrf.mxu0
        %v785 = vadd.f32 %v756, %v784
        %786 = vmatmul.f32.gmra.mxu0 %v648
        %v787 = vpop.f32.mrf.mxu0
        %v788 = vadd.f32 %v759, %v787
        %789 = vdwg.mxu0
        %790 = vst [vmem:[%s224] sm:$0xff] %v779
        %791 = vst [vmem:[%s224 + $0x8] sm:$0xff] %v782
        %s792 = scalar_lea.vmem %s224, 16 [#allocation11]
        %793 = vst [vmem:[%s792] sm:$0xff] %v785
        %794 = vst [vmem:[%s792 + $0x8] sm:$0xff] %v788
        %s795 = sand.u32 %s97, 1
        %s796 = scalar_lea.sflag [#allocation7], %s795
        %s797 = sand.u32 %s97, 1
        %s798 = smul.addr %s797, 32
        %s799 = scalar_lea.vmem [#allocation11], %s798
        // Predicated region
        $region45: #{tpu_custom_call.1} parent=31 // pred_check
          %p800 = pneg %p107
        $region46: #{tpu_custom_call.1} parent=31 // pred_check_branch
          %802 = sbr.rel (%p800) target = $region48
        $region47: #{tpu_custom_call.1} parent=31 // pred_region
          %s803 = smul.u32 2, %s21
          %805 = vsyncadd %s796, 0
          %s806 = smul.addr %s803, 2
          %s807 = smul.addr %s806, 8
          %s808 = scalar_lea.hbm %s3, %s807
          %s809 = sshll.u32 %s799, 4
          %s810 = int_to_ptr.vmem [resolvable:$true] %s809
          %s811 = sshll.u32 %s808, 4
          %s812 = int_to_ptr.hbm [resolvable:$true] %s811
          %817 = dma.vmem_to_hbm [thread:$0]  %s810, 512, %s812, %s796, 128, 128, 8
        $region48: #{tpu_custom_call.1} parent=31 // pred_fallthru
          _
      $region32: #{tpu_custom_call.1} parent=5 // pred_fallthru
        _
      %p818 = scmp.le.s32.totalorder 2, %s16
      // Predicated region
      $region49: #{tpu_custom_call.1} parent=5 // pred_check
        %p819 = pneg %p818
      $region50: #{tpu_custom_call.1} parent=5 // pred_check_branch
        %821 = sbr.rel (%p819) target = $region52
      $region51: #{tpu_custom_call.1} parent=5 // pred_region
        %s822 = ssub.s32 %s16, 2
        // Predicated region
        $region53: #{tpu_custom_call.1} parent=51 // pred_check
          %p823 = pneg %p113
        $region54: #{tpu_custom_call.1} parent=51 // pred_check_branch
          %825 = sbr.rel (%p823) target = $region56
        $region55: #{tpu_custom_call.1} parent=51 // pred_region
          %s826 = sand.u32 %s98, 1
          %s827 = scalar_lea.sflag [#allocation7], %s826
          %s828 = sand.u32 %s98, 1
          %s829 = smul.addr %s828, 32
          %s830 = scalar_lea.vmem [#allocation11], %s829
          %832 = dma.done %s827, 512
        $region56: #{tpu_custom_call.1} parent=51 // pred_fallthru
          _
      $region52: #{tpu_custom_call.1} parent=5 // pred_fallthru
        _
    $region6: #{tpu_custom_call.1} parent=1 // loop_footer
      %s20 = sadd.s32 1, %s16
    $region7: #{tpu_custom_call.1} parent=1 // loop_footer_branch
      %15 = sbr.rel target = $region3
    $region8: #{tpu_custom_call.1} parent=1 // loop_exit
      _
    %833 = vsyncpa [#allocation6], 1
    %s834 = scalar_lea.sflag [#allocation6], 1
    %835 = vsyncpa %s834, 1
    %836 = vsyncpa [#allocation9], 1
    %837 = vsyncpa [#allocation7], 1
    %s838 = scalar_lea.sflag [#allocation7], 1
    %839 = vsyncpa %s838, 1

</llo_original>
